<compile_context>
chip_gen: v6e
topology: v6e:2x2x1
jax: 0.10.0
libtpu: 0.0.40
codegen_flags: <defaults>
</compile_context>

<pallas_src>
import functools

import jax
import jax.numpy as jnp
from jax import lax
from jax.experimental import pallas as pl
from jax.experimental.pallas import tpu as pltpu


# ---- network hyper-parameters (from network_properties) ------------------------
INPUT_DIM = 3            # e.g. (t, x, mu) for an RTE PINN
OUTPUT_DIM = 2           # output_dimension = 2 in the reference module
NEURONS = 32             # network_properties['neurons']
N_HIDDEN_LAYERS = 4      # network_properties['hidden_layers'] -> (N-1) hidden Linear layers
SLAB = 512               # lanes per inner compute slab (caps live vreg footprint)


def _default_compute_dtype():
    """bf16 activations/tanh on v6e/v7x (bf16 VPU/EUP present); f32 on v5e and older."""
    try:
        kind = jax.devices()[0].device_kind.lower()
    except Exception:
        return jnp.float32
    if any(tag in kind for tag in ("v2", "v3", "v4", "v5")):
        return jnp.float32           # no bf16 VALU/EUP: keep activation path in f32
    return jnp.bfloat16


def _make_mlp_kernel(n_slabs, slab, compute_dtype):
    """Fused MLP kernel over one [features, tile_b] batch tile."""

    def mlp_kernel(x_ref, w_in_ref, b_in_ref, w_h_ref, b_h_ref, w_out_ref, b_out_ref,
                   o_ref):
        # x_ref:    [INPUT_DIM, tile_b]        (batch on lanes)
        # w_in_ref: [NEURONS, INPUT_DIM]        b_in_ref: [NEURONS, 1]        (f32 biases)
        # w_h_ref:  [L-1, NEURONS, NEURONS]     b_h_ref:  [L-1, NEURONS, 1]
        # w_out_ref:[OUTPUT_DIM, NEURONS]       b_out_ref:[OUTPUT_DIM, 1]
        # o_ref:    [OUTPUT_DIM, tile_b]        (f32, lane-dense stores)

        # ---- hoisted, loop-invariant weight loads and lane-broadcast biases -----
        # (JAX does not CSE broadcast_in_dim; do these once per grid step.)
        w_in = w_in_ref[...]                                           # compute_dtype
        w_h = [w_h_ref[l] for l in range(N_HIDDEN_LAYERS - 1)]
        w_out = w_out_ref[...]
        b_in = jnp.broadcast_to(b_in_ref[...], (NEURONS, slab))        # f32 [32, slab]
        b_h = [jnp.broadcast_to(b_h_ref[l], (NEURONS, slab))
               for l in range(N_HIDDEN_LAYERS - 1)]
        b_out = jnp.broadcast_to(b_out_ref[...], (OUTPUT_DIM, slab))

        def slab_body(s, carry):
            col = pl.multiple_of(s * slab, slab)
            x = x_ref[:, pl.ds(col, slab)].astype(compute_dtype)       # [3, slab]

            # Input layer (K = 3): MXU dot; the MXU slot is idle (kernel is
            # EUP/tanh-bound), so its latency hides for free.
            z = jnp.dot(w_in, x, preferred_element_type=jnp.float32) + b_in
            h = jnp.tanh(z.astype(compute_dtype))                      # EUP

            # Hidden layers: 32x32 MXU matmuls, f32 accumulation, tanh in
            # compute_dtype (bf16 on v6e/v7x -> 2x EUP rate).
            for l in range(N_HIDDEN_LAYERS - 1):
                z = jnp.dot(w_h[l], h, preferred_element_type=jnp.float32) + b_h[l]
                h = jnp.tanh(z.astype(compute_dtype))

            # Output layer (no activation), f32 out.
            out = jnp.dot(w_out, h, preferred_element_type=jnp.float32) + b_out
            o_ref[:, pl.ds(col, slab)] = out.astype(o_ref.dtype)       # lane-dense store
            return carry

        # Inner slab loop: bounds the live intermediate to [32, slab] per slab;
        # unroll=True keeps full LLO scheduler visibility (trip count is tiny).
        lax.fori_loop(0, n_slabs, slab_body, 0, unroll=True)

    return mlp_kernel


def _choose_tile(n, slab, target_steps, max_tile):
    """Batch tile: multiple of `slab`, >= target_steps grid steps, bounded padding waste."""
    total_slabs = -(-n // slab)                       # ceil(n / slab)
    slabs_per_tile = max(1, -(-total_slabs // target_steps))
    return int(min(slabs_per_tile * slab, max_tile))


@functools.partial(jax.jit,
                   static_argnames=("compute_dtype", "slab", "target_steps", "max_tile"))
def pinns_forward(x, params, compute_dtype=None, slab=SLAB, target_steps=4,
                  max_tile=4096):
    """Pinns.forward.  x: [N, INPUT_DIM] f32 -> [N, OUTPUT_DIM] f32.

    Internally the batch is carried on the lane axis ([features, N]); ragged
    batches are zero-padded up to the tile grid and sliced back.  Because this
    wrapper is jitted, the transpose+pad and the final slice+transpose fuse into
    single small XLA ops around the fused kernel.
    """
    if compute_dtype is None:
        compute_dtype = _default_compute_dtype()

    w_in, b_in, w_h, b_h, w_out, b_out = params
    n = x.shape[0]

    tile_b = _choose_tile(n, slab, target_steps, max_tile)
    n_blocks = pl.cdiv(n, tile_b)
    n_pad = n_blocks * tile_b
    n_slabs = tile_b // slab

    # feature-major + pad (fused by XLA since this wrapper is jitted)
    xt = jnp.pad(x.T, ((0, 0), (0, n_pad - n)))

    # Weights at compute precision (bf16 on v6e/v7x); biases & accumulation stay f32.
    w_in_c = w_in.astype(compute_dtype)
    w_h_c = w_h.astype(compute_dtype)
    w_out_c = w_out.astype(compute_dtype)

    # Advisory cost estimate for XLA's scheduler (overlap the tiny pad/transpose ops).
    w_params = (INPUT_DIM * NEURONS
                + (N_HIDDEN_LAYERS - 1) * NEURONS * NEURONS
                + NEURONS * OUTPUT_DIM)
    b_params = NEURONS + (N_HIDDEN_LAYERS - 1) * NEURONS + OUTPUT_DIM
    w_itemsize = jnp.dtype(compute_dtype).itemsize
    flops = 2 * n_pad * w_params
    transcendentals = n_pad * N_HIDDEN_LAYERS * NEURONS
    bytes_accessed = (n_pad * 4 * (INPUT_DIM + OUTPUT_DIM)
                      + n_blocks * (w_params * w_itemsize + b_params * 4))

    const2 = lambda i: (0, 0)
    const3 = lambda i: (0, 0, 0)

    out_t = pl.pallas_call(
        _make_mlp_kernel(n_slabs, slab, compute_dtype),
        out_shape=jax.ShapeDtypeStruct((OUTPUT_DIM, n_pad), jnp.float32),
        grid_spec=pltpu.PrefetchScalarGridSpec(
            num_scalar_prefetch=0,
            grid=(n_blocks,),
            in_specs=[
                pl.BlockSpec((INPUT_DIM, tile_b), lambda i: (0, i)),             # x tile
                pl.BlockSpec((NEURONS, INPUT_DIM), const2),                      # W_in (resident)
                pl.BlockSpec((NEURONS, 1), const2),                              # b_in
                pl.BlockSpec((N_HIDDEN_LAYERS - 1, NEURONS, NEURONS), const3),   # W_h stack
                pl.BlockSpec((N_HIDDEN_LAYERS - 1, NEURONS, 1), const3),         # b_h stack
                pl.BlockSpec((OUTPUT_DIM, NEURONS), const2),                     # W_out
                pl.BlockSpec((OUTPUT_DIM, 1), const2),                           # b_out
            ],
            out_specs=pl.BlockSpec((OUTPUT_DIM, tile_b), lambda i: (0, i)),      # lane-dense
        ),
        compiler_params=pltpu.CompilerParams(
            dimension_semantics=("parallel",),   # batch tiles shard across TCs (v7x)
        ),
        cost_estimate=pl.CostEstimate(
            flops=int(flops),
            transcendentals=int(transcendentals),
            bytes_accessed=int(bytes_accessed),
        ),
    )(xt, w_in_c, b_in, w_h_c, b_h, w_out_c, b_out)

    return out_t[:, :n].T


def init_params(key):
    """Deterministic synthetic init.

    Weight layout is [out_features, in_features] (PyTorch nn.Linear convention),
    biases are [out_features, 1] so they broadcast along lanes in the kernel.
    """
    ks = jax.random.split(key, 6)
    scale = 0.1
    w_in = scale * jax.random.normal(ks[0], (NEURONS, INPUT_DIM), jnp.float32)
    b_in = scale * jax.random.normal(ks[1], (NEURONS, 1), jnp.float32)
    w_h = scale * jax.random.normal(
        ks[2], (N_HIDDEN_LAYERS - 1, NEURONS, NEURONS), jnp.float32)
    b_h = scale * jax.random.normal(
        ks[3], (N_HIDDEN_LAYERS - 1, NEURONS, 1), jnp.float32)
    w_out = scale * jax.random.normal(ks[4], (OUTPUT_DIM, NEURONS), jnp.float32)
    b_out = scale * jax.random.normal(ks[5], (OUTPUT_DIM, 1), jnp.float32)
    return w_in, b_in, w_h, b_h, w_out, b_out


def pinns_forward_ref(x, params):
    """Pure-JAX reference of Pinns.forward for correctness checking."""
    w_in, b_in, w_h, b_h, w_out, b_out = params
    h = jnp.tanh(x @ w_in.T + b_in[:, 0])
    for l in range(N_HIDDEN_LAYERS - 1):
        h = jnp.tanh(h @ w_h[l].T + b_h[l, :, 0])
    return h @ w_out.T + b_out[:, 0]


if __name__ == "__main__":
    key = jax.random.PRNGKey(0)
    k_x, k_p = jax.random.split(key)

    batch = 2000  # ragged tail on purpose: pads to 2048 -> 4 grid steps of 512 lanes
    x = jax.random.normal(k_x, (batch, INPUT_DIM), jnp.float32)
    params = init_params(k_p)

    ref = pinns_forward_ref(x, params)

    # 1) strict f32 path (the path used on v5e, which has no bf16 VPU/EUP)
    out_f32 = jax.block_until_ready(pinns_forward(x, params, compute_dtype=jnp.float32))
    assert out_f32.shape == (batch, OUTPUT_DIM)
    assert jnp.allclose(out_f32, ref, atol=1e-4, rtol=1e-4), "f32 kernel mismatch vs reference"

    # 2) default path: bf16 activations/tanh on v6e/v7x, f32 elsewhere
    out = jax.block_until_ready(pinns_forward(x, params))
    tol = 3e-2 if _default_compute_dtype() == jnp.bfloat16 else 1e-4
    assert out.shape == (batch, OUTPUT_DIM)
    assert jnp.allclose(out, ref, atol=tol, rtol=tol), "default-dtype kernel mismatch vs reference"

    print("KERNEL_OK")
</pallas_src>

<mosaic_0001>
module attributes {stable_mosaic.version = 11 : i64} {
  func.func @mlp_kernel(%arg0: i32, %arg1: memref<3x512xf32, #tpu.memory_space<vmem>>, %arg2: memref<32x3xf32, #tpu.memory_space<vmem>>, %arg3: memref<32x1xf32, #tpu.memory_space<vmem>>, %arg4: memref<3x32x32xf32, #tpu.memory_space<vmem>>, %arg5: memref<3x32x1xf32, #tpu.memory_space<vmem>>, %arg6: memref<2x32xf32, #tpu.memory_space<vmem>>, %arg7: memref<2x1xf32, #tpu.memory_space<vmem>>, %arg8: memref<2x512xf32, #tpu.memory_space<vmem>>) attributes {dimension_semantics = [#tpu.dimension_semantics<parallel>], iteration_bounds = array<i64: 4>, scalar_prefetch = 0 : i64, scratch_operands = 0 : i64, tpu.core_type = #tpu.core_type<tc>, window_params = [{transform_indices = @transform_0, window_bounds = array<i64: 3, 512>}, {pipeline_mode = #tpu.pipeline_mode<synchronous>, transform_indices = @transform_1, window_bounds = array<i64: 32, 3>}, {pipeline_mode = #tpu.pipeline_mode<synchronous>, transform_indices = @transform_2, window_bounds = array<i64: 32, 1>}, {pipeline_mode = #tpu.pipeline_mode<synchronous>, transform_indices = @transform_3, window_bounds = array<i64: 3, 32, 32>}, {pipeline_mode = #tpu.pipeline_mode<synchronous>, transform_indices = @transform_4, window_bounds = array<i64: 3, 32, 1>}, {pipeline_mode = #tpu.pipeline_mode<synchronous>, transform_indices = @transform_5, window_bounds = array<i64: 2, 32>}, {pipeline_mode = #tpu.pipeline_mode<synchronous>, transform_indices = @transform_6, window_bounds = array<i64: 2, 1>}, {transform_indices = @transform_7, window_bounds = array<i64: 2, 512>}]} {
    %c0 = arith.constant 0 : index
    %c0_0 = arith.constant 0 : index
    %0 = vector.load %arg2[%c0, %c0_0] : memref<32x3xf32, #tpu.memory_space<vmem>>, vector<32x3xf32>
    %c0_1 = arith.constant 0 : index
    %c0_2 = arith.constant 0 : index
    %c0_3 = arith.constant 0 : index
    %1 = vector.load %arg4[%c0_1, %c0_2, %c0_3] : memref<3x32x32xf32, #tpu.memory_space<vmem>>, vector<1x32x32xf32>
    %2 = vector.shape_cast %1 : vector<1x32x32xf32> to vector<32x32xf32>
    %c1 = arith.constant 1 : index
    %c0_4 = arith.constant 0 : index
    %c0_5 = arith.constant 0 : index
    %3 = vector.load %arg4[%c1, %c0_4, %c0_5] : memref<3x32x32xf32, #tpu.memory_space<vmem>>, vector<1x32x32xf32>
    %4 = vector.shape_cast %3 : vector<1x32x32xf32> to vector<32x32xf32>
    %c2 = arith.constant 2 : index
    %c0_6 = arith.constant 0 : index
    %c0_7 = arith.constant 0 : index
    %5 = vector.load %arg4[%c2, %c0_6, %c0_7] : memref<3x32x32xf32, #tpu.memory_space<vmem>>, vector<1x32x32xf32>
    %6 = vector.shape_cast %5 : vector<1x32x32xf32> to vector<32x32xf32>
    %c0_8 = arith.constant 0 : index
    %c0_9 = arith.constant 0 : index
    %7 = vector.load %arg6[%c0_8, %c0_9] : memref<2x32xf32, #tpu.memory_space<vmem>>, vector<2x32xf32>
    %c0_10 = arith.constant 0 : index
    %c0_11 = arith.constant 0 : index
    %8 = vector.load %arg3[%c0_10, %c0_11] : memref<32x1xf32, #tpu.memory_space<vmem>>, vector<32x1xf32>
    %9 = vector.shape_cast %8 : vector<32x1xf32> to vector<32x1xf32>
    %10 = vector.broadcast %9 : vector<32x1xf32> to vector<32x512xf32>
    %c0_12 = arith.constant 0 : index
    %c0_13 = arith.constant 0 : index
    %c0_14 = arith.constant 0 : index
    %11 = vector.load %arg5[%c0_12, %c0_13, %c0_14] : memref<3x32x1xf32, #tpu.memory_space<vmem>>, vector<1x32x1xf32>
    %12 = vector.shape_cast %11 : vector<1x32x1xf32> to vector<32x1xf32>
    %13 = vector.shape_cast %12 : vector<32x1xf32> to vector<32x1xf32>
    %14 = vector.broadcast %13 : vector<32x1xf32> to vector<32x512xf32>
    %c1_15 = arith.constant 1 : index
    %c0_16 = arith.constant 0 : index
    %c0_17 = arith.constant 0 : index
    %15 = vector.load %arg5[%c1_15, %c0_16, %c0_17] : memref<3x32x1xf32, #tpu.memory_space<vmem>>, vector<1x32x1xf32>
    %16 = vector.shape_cast %15 : vector<1x32x1xf32> to vector<32x1xf32>
    %17 = vector.shape_cast %16 : vector<32x1xf32> to vector<32x1xf32>
    %18 = vector.broadcast %17 : vector<32x1xf32> to vector<32x512xf32>
    %c2_18 = arith.constant 2 : index
    %c0_19 = arith.constant 0 : index
    %c0_20 = arith.constant 0 : index
    %19 = vector.load %arg5[%c2_18, %c0_19, %c0_20] : memref<3x32x1xf32, #tpu.memory_space<vmem>>, vector<1x32x1xf32>
    %20 = vector.shape_cast %19 : vector<1x32x1xf32> to vector<32x1xf32>
    %21 = vector.shape_cast %20 : vector<32x1xf32> to vector<32x1xf32>
    %22 = vector.broadcast %21 : vector<32x1xf32> to vector<32x512xf32>
    %c0_21 = arith.constant 0 : index
    %c0_22 = arith.constant 0 : index
    %23 = vector.load %arg7[%c0_21, %c0_22] : memref<2x1xf32, #tpu.memory_space<vmem>>, vector<2x1xf32>
    %24 = vector.shape_cast %23 : vector<2x1xf32> to vector<2x1xf32>
    %25 = vector.broadcast %24 : vector<2x1xf32> to vector<2x512xf32>
    %c0_i32 = arith.constant 0 : i32
    %c512_i32 = arith.constant 512 : i32
    %26 = arith.muli %c0_i32, %c512_i32 : i32
    %27 = tpu.assume_multiple %26, 512 : i32
    %c0_23 = arith.constant 0 : index
    %28 = arith.index_cast %27 : i32 to index
    %29 = vector.load %arg1[%c0_23, %28] : memref<3x512xf32, #tpu.memory_space<vmem>>, vector<3x512xf32>
    %cst = arith.constant dense<0.000000e+00> : vector<32x512xf32>
    %30 = tpu.matmul %0, %29, %cst {dimension_numbers = #tpu.dot_dimension_numbers<[1], [0], [0], [1], [0, 0, 1, 1], [], []>} : vector<32x3xf32>, vector<3x512xf32>, vector<32x512xf32> -> vector<32x512xf32>
    %31 = arith.addf %30, %10 : vector<32x512xf32>
    %32 = math.tanh %31 : vector<32x512xf32>
    %cst_24 = arith.constant dense<0.000000e+00> : vector<32x512xf32>
    %33 = tpu.matmul %2, %32, %cst_24 {dimension_numbers = #tpu.dot_dimension_numbers<[1], [0], [0], [1], [0, 0, 1, 1], [], []>} : vector<32x32xf32>, vector<32x512xf32>, vector<32x512xf32> -> vector<32x512xf32>
    %34 = arith.addf %33, %14 : vector<32x512xf32>
    %35 = math.tanh %34 : vector<32x512xf32>
    %cst_25 = arith.constant dense<0.000000e+00> : vector<32x512xf32>
    %36 = tpu.matmul %4, %35, %cst_25 {dimension_numbers = #tpu.dot_dimension_numbers<[1], [0], [0], [1], [0, 0, 1, 1], [], []>} : vector<32x32xf32>, vector<32x512xf32>, vector<32x512xf32> -> vector<32x512xf32>
    %37 = arith.addf %36, %18 : vector<32x512xf32>
    %38 = math.tanh %37 : vector<32x512xf32>
    %cst_26 = arith.constant dense<0.000000e+00> : vector<32x512xf32>
    %39 = tpu.matmul %6, %38, %cst_26 {dimension_numbers = #tpu.dot_dimension_numbers<[1], [0], [0], [1], [0, 0, 1, 1], [], []>} : vector<32x32xf32>, vector<32x512xf32>, vector<32x512xf32> -> vector<32x512xf32>
    %40 = arith.addf %39, %22 : vector<32x512xf32>
    %41 = math.tanh %40 : vector<32x512xf32>
    %cst_27 = arith.constant dense<0.000000e+00> : vector<2x512xf32>
    %42 = tpu.matmul %7, %41, %cst_27 {dimension_numbers = #tpu.dot_dimension_numbers<[1], [0], [0], [1], [0, 0, 1, 1], [], []>} : vector<2x32xf32>, vector<32x512xf32>, vector<2x512xf32> -> vector<2x512xf32>
    %43 = arith.addf %42, %25 : vector<2x512xf32>
    %c0_28 = arith.constant 0 : index
    %44 = arith.index_cast %27 : i32 to index
    %45 = vector.load %arg8[%c0_28, %44] : memref<2x512xf32, #tpu.memory_space<vmem>>, vector<2x512xf32>
    tpu.vector_store %arg8[%c0_28, %44], %43 {strides = array<i32>} : memref<2x512xf32, #tpu.memory_space<vmem>>, vector<2x512xf32>,
    %c1_i32 = arith.constant 1 : i32
    return
  }
  func.func @transform_0(%arg0: i32) -> (i32, i32) {
    %c0_i32 = arith.constant 0 : i32
    %c0_i32_0 = arith.constant 0 : i32
    return %c0_i32, %arg0 : i32, i32
  }
  func.func @transform_1(%arg0: i32) -> (i32, i32) {
    %c0_i32 = arith.constant 0 : i32
    %c0_i32_0 = arith.constant 0 : i32
    %c0_i32_1 = arith.constant 0 : i32
    return %c0_i32, %c0_i32_0 : i32, i32
  }
  func.func @transform_2(%arg0: i32) -> (i32, i32) {
    %c0_i32 = arith.constant 0 : i32
    %c0_i32_0 = arith.constant 0 : i32
    %c0_i32_1 = arith.constant 0 : i32
    return %c0_i32, %c0_i32_0 : i32, i32
  }
  func.func @transform_3(%arg0: i32) -> (i32, i32, i32) {
    %c0_i32 = arith.constant 0 : i32
    %c0_i32_0 = arith.constant 0 : i32
    %c0_i32_1 = arith.constant 0 : i32
    %c0_i32_2 = arith.constant 0 : i32
    return %c0_i32, %c0_i32_0, %c0_i32_1 : i32, i32, i32
  }
  func.func @transform_4(%arg0: i32) -> (i32, i32, i32) {
    %c0_i32 = arith.constant 0 : i32
    %c0_i32_0 = arith.constant 0 : i32
    %c0_i32_1 = arith.constant 0 : i32
    %c0_i32_2 = arith.constant 0 : i32
    return %c0_i32, %c0_i32_0, %c0_i32_1 : i32, i32, i32
  }
  func.func @transform_5(%arg0: i32) -> (i32, i32) {
    %c0_i32 = arith.constant 0 : i32
    %c0_i32_0 = arith.constant 0 : i32
    %c0_i32_1 = arith.constant 0 : i32
    return %c0_i32, %c0_i32_0 : i32, i32
  }
  func.func @transform_6(%arg0: i32) -> (i32, i32) {
    %c0_i32 = arith.constant 0 : i32
    %c0_i32_0 = arith.constant 0 : i32
    %c0_i32_1 = arith.constant 0 : i32
    return %c0_i32, %c0_i32_0 : i32, i32
  }
  func.func @transform_7(%arg0: i32) -> (i32, i32) {
    %c0_i32 = arith.constant 0 : i32
    %c0_i32_0 = arith.constant 0 : i32
    return %c0_i32, %arg0 : i32, i32
  }
}

</mosaic_0001>

<llo_original>
// kernel: pinns_forward.1
$region0: #{pinns_forward.1}
  #allocation0 [shape = 'u32[]', space=smem, size = 0x4, offset = 0x4, fixed_abs, tag = 'smem constant byte address 0x4 - core index']
  #allocation1 [shape = 'u32[144,128]{1,0:T(1,128)}', space=vmem, size = 0x12000, scoped, tag = 'internal scratch']
  %s0 = inlined_call_operand.vmem [shape: f32[3,2048], index: 0, kind: input, shape index: {}]
  %s1 = inlined_call_operand.vmem [shape: f32[32,3], index: 1, kind: input, shape index: {}]
  %s2 = inlined_call_operand.vmem [shape: f32[32,1], index: 2, kind: input, shape index: {}]
  %s3 = inlined_call_operand.vmem [shape: f32[3,32,32], index: 3, kind: input, shape index: {}]
  %s4 = inlined_call_operand.vmem [shape: f32[3,32,1], index: 4, kind: input, shape index: {}]
  %s5 = inlined_call_operand.vmem [shape: f32[2,32], index: 5, kind: input, shape index: {}]
  %s6 = inlined_call_operand.vmem [shape: f32[2,1], index: 6, kind: input, shape index: {}]
  %s7 = inlined_call_operand.vmem [shape: f32[2,2048], index: 7, kind: output, shape index: {}]
  %s8 = sld [smem:[#allocation0]]
  $region61: #{pinns_forward.1} parent=0
    _
  %s10 = ssub.s32 1, %s8
  %s11 = scalar_select 0, %s10, %s8
  loop: start=0, step=1, limit=6
  $region2: #{pinns_forward.1} parent=0 // loop_pre_header
    _
  $region3: #{pinns_forward.1} parent=0 // loop_header
    %s13 = sphi 0, %s17
    %p14 = scmp.ge.s32.totalorder %s13, 6
    %s23 = sphi 0, %s25
    %s26 = sphi 0, %s23
    %s27 = sphi 0, %s26
    %s43 = sphi 0, %s27
    %s47 = sphi 0, %s47
    %s49 = sphi 0, %s47
    %s50 = sphi 0, %s49
    %s64 = sphi 0, %s50
    %s68 = sphi 0, %s68
    %s70 = sphi 0, %s68
    %s71 = sphi 0, %s70
    %s85 = sphi 0, %s71
    %s89 = sphi 0, %s89
    %s91 = sphi 0, %s89
    %s92 = sphi 0, %s91
    %s106 = sphi 0, %s92
    %s110 = sphi 0, %s110
    %s112 = sphi 0, %s110
    %s113 = sphi 0, %s112
    %s127 = sphi 0, %s113
    %s131 = sphi 0, %s131
    %s133 = sphi 0, %s131
    %s134 = sphi 0, %s133
    %s148 = sphi 0, %s134
    %s152 = sphi 0, %s152
    %s154 = sphi 0, %s152
    %s155 = sphi 0, %s154
    %s169 = sphi 0, %s155
    %s175 = sphi 0, %s177
    %s178 = sphi 0, %s175
    %s179 = sphi 0, %s178
    %s195 = sphi 0, %s179
  $region4: #{pinns_forward.1} parent=0 // loop_header_branch
    %16 = sbr.rel (%p14) target = $region8
  $region5: #{pinns_forward.1} parent=0 // loop_body
    %s18 = ssub.s32 %s13, 1
    %s19 = ssub.s32 %s13, 2
    %s20 = sadd.s32 %s13, 1
    %s21 = ssub.s32 %s13, %s20
    %p22 = scmp.eq.s32.totalorder %s21, 0
    %s24 = sadd.s32 %s23, 1
    %s25 = scalar_select %p22, %s23, %s24
    %p28 = pneg %p22
    %p29 = scmp.eq.s32.totalorder %s13, 3
    %p30 = por %p28, %p29
    %p31 = scmp.ne.s32.totalorder %s23, %s26
    %p32 = scmp.eq.s32.totalorder %s13, 0
    %p33 = por %p31, %p32
    %p34 = scmp.ne.s32.totalorder %s23, %s26
    %p35 = scmp.eq.s32.totalorder %s18, 3
    %p36 = por %p34, %p35
    %p37 = scmp.ne.s32.totalorder %s26, %s27
    %p38 = scmp.eq.s32.totalorder %s18, 0
    %p39 = por %p37, %p38
    %p40 = scmp.ne.s32.totalorder %s26, %s27
    %p41 = scmp.eq.s32.totalorder %s19, 3
    %p42 = por %p40, %p41
    %p44 = scmp.ne.s32.totalorder %s27, %s43
    %p45 = scmp.eq.s32.totalorder %s19, 0
    %p46 = por %p44, %p45
    %s48 = sadd.s32 %s47, 1
    %p51 = scmp.eq.s32.totalorder %s13, 3
    %p52 = scmp.ne.s32.totalorder %s47, %s49
    %p53 = scmp.eq.s32.totalorder %s13, 0
    %p54 = por %p52, %p53
    %p55 = scmp.ne.s32.totalorder %s47, %s49
    %p56 = scmp.eq.s32.totalorder %s18, 3
    %p57 = por %p55, %p56
    %p58 = scmp.ne.s32.totalorder %s49, %s50
    %p59 = scmp.eq.s32.totalorder %s18, 0
    %p60 = por %p58, %p59
    %p61 = scmp.ne.s32.totalorder %s49, %s50
    %p62 = scmp.eq.s32.totalorder %s19, 3
    %p63 = por %p61, %p62
    %p65 = scmp.ne.s32.totalorder %s50, %s64
    %p66 = scmp.eq.s32.totalorder %s19, 0
    %p67 = por %p65, %p66
    %s69 = sadd.s32 %s68, 1
    %p72 = scmp.eq.s32.totalorder %s13, 3
    %p73 = scmp.ne.s32.totalorder %s68, %s70
    %p74 = scmp.eq.s32.totalorder %s13, 0
    %p75 = por %p73, %p74
    %p76 = scmp.ne.s32.totalorder %s68, %s70
    %p77 = scmp.eq.s32.totalorder %s18, 3
    %p78 = por %p76, %p77
    %p79 = scmp.ne.s32.totalorder %s70, %s71
    %p80 = scmp.eq.s32.totalorder %s18, 0
    %p81 = por %p79, %p80
    %p82 = scmp.ne.s32.totalorder %s70, %s71
    %p83 = scmp.eq.s32.totalorder %s19, 3
    %p84 = por %p82, %p83
    %p86 = scmp.ne.s32.totalorder %s71, %s85
    %p87 = scmp.eq.s32.totalorder %s19, 0
    %p88 = por %p86, %p87
    %s90 = sadd.s32 %s89, 1
    %p93 = scmp.eq.s32.totalorder %s13, 3
    %p94 = scmp.ne.s32.totalorder %s89, %s91
    %p95 = scmp.eq.s32.totalorder %s13, 0
    %p96 = por %p94, %p95
    %p97 = scmp.ne.s32.totalorder %s89, %s91
    %p98 = scmp.eq.s32.totalorder %s18, 3
    %p99 = por %p97, %p98
    %p100 = scmp.ne.s32.totalorder %s91, %s92
    %p101 = scmp.eq.s32.totalorder %s18, 0
    %p102 = por %p100, %p101
    %p103 = scmp.ne.s32.totalorder %s91, %s92
    %p104 = scmp.eq.s32.totalorder %s19, 3
    %p105 = por %p103, %p104
    %p107 = scmp.ne.s32.totalorder %s92, %s106
    %p108 = scmp.eq.s32.totalorder %s19, 0
    %p109 = por %p107, %p108
    %s111 = sadd.s32 %s110, 1
    %p114 = scmp.eq.s32.totalorder %s13, 3
    %p115 = scmp.ne.s32.totalorder %s110, %s112
    %p116 = scmp.eq.s32.totalorder %s13, 0
    %p117 = por %p115, %p116
    %p118 = scmp.ne.s32.totalorder %s110, %s112
    %p119 = scmp.eq.s32.totalorder %s18, 3
    %p120 = por %p118, %p119
    %p121 = scmp.ne.s32.totalorder %s112, %s113
    %p122 = scmp.eq.s32.totalorder %s18, 0
    %p123 = por %p121, %p122
    %p124 = scmp.ne.s32.totalorder %s112, %s113
    %p125 = scmp.eq.s32.totalorder %s19, 3
    %p126 = por %p124, %p125
    %p128 = scmp.ne.s32.totalorder %s113, %s127
    %p129 = scmp.eq.s32.totalorder %s19, 0
    %p130 = por %p128, %p129
    %s132 = sadd.s32 %s131, 1
    %p135 = scmp.eq.s32.totalorder %s13, 3
    %p136 = scmp.ne.s32.totalorder %s131, %s133
    %p137 = scmp.eq.s32.totalorder %s13, 0
    %p138 = por %p136, %p137
    %p139 = scmp.ne.s32.totalorder %s131, %s133
    %p140 = scmp.eq.s32.totalorder %s18, 3
    %p141 = por %p139, %p140
    %p142 = scmp.ne.s32.totalorder %s133, %s134
    %p143 = scmp.eq.s32.totalorder %s18, 0
    %p144 = por %p142, %p143
    %p145 = scmp.ne.s32.totalorder %s133, %s134
    %p146 = scmp.eq.s32.totalorder %s19, 3
    %p147 = por %p145, %p146
    %p149 = scmp.ne.s32.totalorder %s134, %s148
    %p150 = scmp.eq.s32.totalorder %s19, 0
    %p151 = por %p149, %p150
    %s153 = sadd.s32 %s152, 1
    %p156 = scmp.eq.s32.totalorder %s13, 3
    %p157 = scmp.ne.s32.totalorder %s152, %s154
    %p158 = scmp.eq.s32.totalorder %s13, 0
    %p159 = por %p157, %p158
    %p160 = scmp.ne.s32.totalorder %s152, %s154
    %p161 = scmp.eq.s32.totalorder %s18, 3
    %p162 = por %p160, %p161
    %p163 = scmp.ne.s32.totalorder %s154, %s155
    %p164 = scmp.eq.s32.totalorder %s18, 0
    %p165 = por %p163, %p164
    %p166 = scmp.ne.s32.totalorder %s154, %s155
    %p167 = scmp.eq.s32.totalorder %s19, 3
    %p168 = por %p166, %p167
    %p170 = scmp.ne.s32.totalorder %s155, %s169
    %p171 = scmp.eq.s32.totalorder %s19, 0
    %p172 = por %p170, %p171
    %s173 = ssub.s32 %s13, %s20
    %p174 = scmp.eq.s32.totalorder %s173, 0
    %s176 = sadd.s32 %s175, 1
    %s177 = scalar_select %p174, %s175, %s176
    %p180 = pneg %p174
    %p181 = scmp.eq.s32.totalorder %s13, 3
    %p182 = por %p180, %p181
    %p183 = scmp.ne.s32.totalorder %s175, %s178
    %p184 = scmp.eq.s32.totalorder %s13, 0
    %p185 = por %p183, %p184
    %p186 = scmp.ne.s32.totalorder %s175, %s178
    %p187 = scmp.eq.s32.totalorder %s18, 3
    %p188 = por %p186, %p187
    %p189 = scmp.ne.s32.totalorder %s178, %s179
    %p190 = scmp.eq.s32.totalorder %s18, 0
    %p191 = por %p189, %p190
    %p192 = scmp.ne.s32.totalorder %s178, %s179
    %p193 = scmp.eq.s32.totalorder %s19, 3
    %p194 = por %p192, %p193
    %p196 = scmp.ne.s32.totalorder %s179, %s195
    %p197 = scmp.eq.s32.totalorder %s19, 0
    %p198 = por %p196, %p197
    %p199 = scmp.le.s32.totalorder 1, %s13
    %p200 = scmp.lt.s32.totalorder %s13, 5
    %p201 = pnand %p199, %p200
    %p202 = pneg %p201
    // Predicated region
    $region9: #{pinns_forward.1} parent=5 // pred_check
      _
    $region10: #{pinns_forward.1} parent=5 // pred_check_branch
      %204 = sbr.rel (%p201) target = $region12
    $region11: #{pinns_forward.1} parent=5 // pred_region
      %s205 = ssub.s32 %s13, 1
      // Predicated region
      $region13: #{pinns_forward.1} parent=11 // pred_check
        %p206 = pneg %p60
      $region14: #{pinns_forward.1} parent=11 // pred_check_branch
        %208 = sbr.rel (%p206) target = $region16
      $region15: #{pinns_forward.1} parent=11 // pred_region
        _
      $region16: #{pinns_forward.1} parent=11 // pred_fallthru
        _
      // Predicated region
      $region17: #{pinns_forward.1} parent=11 // pred_check
        %p209 = pneg %p81
      $region18: #{pinns_forward.1} parent=11 // pred_check_branch
        %211 = sbr.rel (%p209) target = $region20
      $region19: #{pinns_forward.1} parent=11 // pred_region
        _
      $region20: #{pinns_forward.1} parent=11 // pred_fallthru
        _
      // Predicated region
      $region21: #{pinns_forward.1} parent=11 // pred_check
        %p212 = pneg %p102
      $region22: #{pinns_forward.1} parent=11 // pred_check_branch
        %214 = sbr.rel (%p212) target = $region24
      $region23: #{pinns_forward.1} parent=11 // pred_region
        _
      $region24: #{pinns_forward.1} parent=11 // pred_fallthru
        _
      // Predicated region
      $region25: #{pinns_forward.1} parent=11 // pred_check
        %p215 = pneg %p123
      $region26: #{pinns_forward.1} parent=11 // pred_check_branch
        %217 = sbr.rel (%p215) target = $region28
      $region27: #{pinns_forward.1} parent=11 // pred_region
        _
      $region28: #{pinns_forward.1} parent=11 // pred_fallthru
        _
      // Predicated region
      $region29: #{pinns_forward.1} parent=11 // pred_check
        %p218 = pneg %p144
      $region30: #{pinns_forward.1} parent=11 // pred_check_branch
        %220 = sbr.rel (%p218) target = $region32
      $region31: #{pinns_forward.1} parent=11 // pred_region
        _
      $region32: #{pinns_forward.1} parent=11 // pred_fallthru
        _
      // Predicated region
      $region33: #{pinns_forward.1} parent=11 // pred_check
        %p221 = pneg %p165
      $region34: #{pinns_forward.1} parent=11 // pred_check_branch
        %223 = sbr.rel (%p221) target = $region36
      $region35: #{pinns_forward.1} parent=11 // pred_region
        _
      $region36: #{pinns_forward.1} parent=11 // pred_fallthru
        _
    $region12: #{pinns_forward.1} parent=5 // pred_fallthru
      _
    %p224 = scmp.lt.s32.totalorder %s13, 4
    // Predicated region
    $region37: #{pinns_forward.1} parent=5 // pred_check
      %p225 = pneg %p224
    $region38: #{pinns_forward.1} parent=5 // pred_check_branch
      %227 = sbr.rel (%p225) target = $region40
    $region39: #{pinns_forward.1} parent=5 // pred_region
      // Predicated region
      $region41: #{pinns_forward.1} parent=39 // pred_check
        %p228 = pneg %p33
      $region42: #{pinns_forward.1} parent=39 // pred_check_branch
        %230 = sbr.rel (%p228) target = $region44
      $region43: #{pinns_forward.1} parent=39 // pred_region
        %s231 = smul.u32 4, %s13
        %p232 = scmp.lt.s32.totalorder %s231, 15
        %s233 = scalar_select %p232, %s231, 15
        %s234 = smul.addr %s233, 4
        %s235 = scalar_lea.vmem %s0, %s234
        %s236 = smul.u32 4, %s13
      $region44: #{pinns_forward.1} parent=39 // pred_fallthru
        _
    $region40: #{pinns_forward.1} parent=5 // pred_fallthru
      _
    %p237 = scmp.le.s32.totalorder 1, %s13
    %p238 = scmp.lt.s32.totalorder %s13, 5
    %p239 = pnand %p237, %p238
    %p240 = pneg %p239
    // Predicated region
    $region45: #{pinns_forward.1} parent=5 // pred_check
      _
    $region46: #{pinns_forward.1} parent=5 // pred_check_branch
      %242 = sbr.rel (%p239) target = $region48
    $region47: #{pinns_forward.1} parent=5 // pred_region
      %s243 = ssub.s32 %s13, 1
      %s244 = smul.u32 4, %s18
      %p245 = scmp.lt.s32.totalorder %s244, 15
      %s246 = scalar_select %p245, %s244, 15
      %s247 = smul.addr %s246, 4
      %s248 = scalar_lea.vmem %s0, %s247
      %p249 = pneg %p39
      %p250 = pneg %p36
      %p251 = pneg %p60
      %p252 = pneg %p57
      %p253 = pneg %p81
      %p254 = pneg %p78
      %p255 = pneg %p102
      %p256 = pneg %p99
      %p257 = pneg %p123
      %p258 = pneg %p120
      %p259 = pneg %p144
      %p260 = pneg %p141
      %p261 = pneg %p165
      %p262 = pneg %p162
      %p263 = pneg %p191
      %p264 = pneg %p188
      %s265 = smul.u32 4, %s18
      %p266 = scmp.lt.s32.totalorder %s265, 15
      %s267 = scalar_select %p266, %s265, 15
      %s268 = smul.addr %s267, 2
      %s269 = scalar_lea.vmem %s7, %s268
      %s270 = smul.u32 4, %s18
      %p271 = scmp.lt.s32.totalorder %s270, 15
      %s272 = scalar_select %p271, %s270, 15
      %s273 = smul.addr %s272, 4
      %s274 = scalar_lea.vmem %s0, %s273
      %s275 = smul.u32 4, %s18
      %s276 = smul.u32 4, %s18
      %p277 = scmp.lt.s32.totalorder %s276, 15
      %s278 = scalar_select %p277, %s276, 15
      %s279 = smul.addr %s278, 2
      %s280 = scalar_lea.vmem %s7, %s279
      %s281 = smul.u32 4, %s18
      %v282 = vld [vmem:[%s1] sm:$0xff]
      %v283 = vld [vmem:[%s1 + $0x8] sm:$0xff]
      %v284 = vld [vmem:[%s1 + $0x10] sm:$0xff]
      %v285 = vld [vmem:[%s1 + $0x18] sm:$0xff]
      %v286 = vld [vmem:[%s3] sm:$0xff]
      %v287 = vld [vmem:[%s3 + $0x8] sm:$0xff]
      %v288 = vld [vmem:[%s3 + $0x10] sm:$0xff]
      %v289 = vld [vmem:[%s3 + $0x18] sm:$0xff]
      %s290 = scalar_lea.vmem %s3, 32
      %v291 = vld [vmem:[%s290] sm:$0xff]
      %v292 = vld [vmem:[%s290 + $0x8] sm:$0xff]
      %v293 = vld [vmem:[%s290 + $0x10] sm:$0xff]
      %v294 = vld [vmem:[%s290 + $0x18] sm:$0xff]
      %s295 = scalar_lea.vmem %s3, 64
      %v296 = vld [vmem:[%s295] sm:$0xff]
      %v297 = vld [vmem:[%s295 + $0x8] sm:$0xff]
      %v298 = vld [vmem:[%s295 + $0x10] sm:$0xff]
      %v299 = vld [vmem:[%s295 + $0x18] sm:$0xff]
      %v300 = vld [vmem:[%s5] sm:$0x3]
      %v301 = vld [vmem:[%s2] sm:$0xff]
      %v302 = vld [vmem:[%s2 + $0x8] sm:$0xff]
      %v303 = vld [vmem:[%s2 + $0x10] sm:$0xff]
      %v304 = vld [vmem:[%s2 + $0x18] sm:$0xff]
      %306 = vset.pattern.permute.xlu0 0
      %307 = vperm.xlu0 %306, %v301
      %v308 = vpop.permute.xlu0 %307
      %311 = vset.pattern.permute.xlu0 0
      %312 = vperm.xlu0 %311, %v302
      %v313 = vpop.permute.xlu0 %312
      %316 = vset.pattern.permute.xlu0 0
      %317 = vperm.xlu0 %316, %v303
      %v318 = vpop.permute.xlu0 %317
      %321 = vset.pattern.permute.xlu0 0
      %322 = vperm.xlu0 %321, %v304
      %v323 = vpop.permute.xlu0 %322
      %v325 = vld [vmem:[%s4] sm:$0xff]
      %v326 = vld [vmem:[%s4 + $0x8] sm:$0xff]
      %v327 = vld [vmem:[%s4 + $0x10] sm:$0xff]
      %v328 = vld [vmem:[%s4 + $0x18] sm:$0xff]
      %330 = vset.pattern.permute.xlu0 0
      %331 = vperm.xlu0 %330, %v325
      %v332 = vpop.permute.xlu0 %331
      %335 = vset.pattern.permute.xlu0 0
      %336 = vperm.xlu0 %335, %v326
      %v337 = vpop.permute.xlu0 %336
      %340 = vset.pattern.permute.xlu0 0
      %341 = vperm.xlu0 %340, %v327
      %v342 = vpop.permute.xlu0 %341
      %345 = vset.pattern.permute.xlu0 0
      %346 = vperm.xlu0 %345, %v328
      %v347 = vpop.permute.xlu0 %346
      %s349 = scalar_lea.vmem %s4, 32
      %v350 = vld [vmem:[%s349] sm:$0xff]
      %v351 = vld [vmem:[%s349 + $0x8] sm:$0xff]
      %v352 = vld [vmem:[%s349 + $0x10] sm:$0xff]
      %v353 = vld [vmem:[%s349 + $0x18] sm:$0xff]
      %355 = vset.pattern.permute.xlu0 0
      %356 = vperm.xlu0 %355, %v350
      %v357 = vpop.permute.xlu0 %356
      %360 = vset.pattern.permute.xlu0 0
      %361 = vperm.xlu0 %360, %v351
      %v362 = vpop.permute.xlu0 %361
      %365 = vset.pattern.permute.xlu0 0
      %366 = vperm.xlu0 %365, %v352
      %v367 = vpop.permute.xlu0 %366
      %370 = vset.pattern.permute.xlu0 0
      %371 = vperm.xlu0 %370, %v353
      %v372 = vpop.permute.xlu0 %371
      %s374 = scalar_lea.vmem %s4, 64
      %v375 = vld [vmem:[%s374] sm:$0xff]
      %v376 = vld [vmem:[%s374 + $0x8] sm:$0xff]
      %v377 = vld [vmem:[%s374 + $0x10] sm:$0xff]
      %v378 = vld [vmem:[%s374 + $0x18] sm:$0xff]
      %380 = vset.pattern.permute.xlu0 0
      %381 = vperm.xlu0 %380, %v375
      %v382 = vpop.permute.xlu0 %381
      %385 = vset.pattern.permute.xlu0 0
      %386 = vperm.xlu0 %385, %v376
      %v387 = vpop.permute.xlu0 %386
      %390 = vset.pattern.permute.xlu0 0
      %391 = vperm.xlu0 %390, %v377
      %v392 = vpop.permute.xlu0 %391
      %395 = vset.pattern.permute.xlu0 0
      %396 = vperm.xlu0 %395, %v378
      %v397 = vpop.permute.xlu0 %396
      %v399 = vld [vmem:[%s6] sm:$0x3]
      %401 = vset.pattern.permute.xlu0 0
      %402 = vperm.xlu0 %401, %v399
      %v403 = vpop.permute.xlu0 %402
      %v405 = vld [vmem:[%s274] sm:$0x77]
      %v406 = vld [vmem:[%s274 + $0x8] sm:$0x77]
      %v409 = vcombine.high %v405, %v405
      %v410 = vcombine.high %v406, %v406
      %vm411 = vcmask 23552
      %v413 = vsel %vm411, %v282, 0
      %v416 = vsel %vm411, %v283, 0
      %v419 = vsel %vm411, %v284, 0
      %v422 = vsel %vm411, %v285, 0
      %vm424 = vcmask 1042432
      %v425 = vsel %vm424, %v405, 0
      %v427 = vsel %vm424, %v409, 0
      %v429 = vsel %vm424, %v406, 0
      %v431 = vsel %vm424, %v410, 0
      %433 = vmatprep.subr.mxu0 0.0
      %434 = vmatpush1.msra.mxu0 0.0
      %435 = vmatprep.subr.mxu0 0.0
      %436 = vmatpush1.msra.mxu0 0.0
      %437 = vmatprep.subr.mxu0 0.0
      %438 = vmatpush1.msra.mxu0 0.0
      %439 = vmatprep.subr.mxu0 0.0
      %440 = vmatpush1.msra.mxu0 0.0
      %441 = vmatprep.subr.mxu0 0.0
      %442 = vmatpush1.msra.mxu0 0.0
      %443 = vmatprep.subr.mxu0 0.0
      %444 = vmatpush1.msra.mxu0 0.0
      %445 = vmatprep.subr.mxu0 0.0
      %446 = vmatpush1.msra.mxu0 0.0
      %447 = vmatprep.subr.mxu0 0.0
      %448 = vmatpush1.msra.mxu0 0.0
      %449 = vmatprep.subr.mxu0 0.0
      %450 = vmatpush1.msra.mxu0 0.0
      %451 = vmatprep.subr.mxu0 0.0
      %452 = vmatpush1.msra.mxu0 0.0
      %453 = vmatprep.subr.mxu0 0.0
      %454 = vmatpush1.msra.mxu0 0.0
      %455 = vmatprep.subr.mxu0 0.0
      %456 = vmatpush1.msra.mxu0 0.0
      %457 = vmatprep.subr.mxu0 0.0
      %458 = vmatpush1.msra.mxu0 0.0
      %459 = vmatprep.subr.mxu0 0.0
      %460 = vmatpush1.msra.mxu0 0.0
      %461 = vmatprep.subr.mxu0 0.0
      %462 = vmatpush1.msra.mxu0 0.0
      %463 = vmatprep.subr.mxu0 %v427
      %464 = vmatpush1.msra.mxu0 %v425
      %465 = vmatprep.subr.mxu0 0.0
      %466 = vmatpush2.msra.mxu0 0.0
      %467 = vmatprep.subr.mxu0 0.0
      %468 = vmatpush2.msra.mxu0 0.0
      %469 = vmatprep.subr.mxu0 0.0
      %470 = vmatpush2.msra.mxu0 0.0
      %471 = vmatprep.subr.mxu0 0.0
      %472 = vmatpush2.msra.mxu0 0.0
      %473 = vmatprep.subr.mxu0 0.0
      %474 = vmatpush2.msra.mxu0 0.0
      %475 = vmatprep.subr.mxu0 0.0
      %476 = vmatpush2.msra.mxu0 0.0
      %477 = vmatprep.subr.mxu0 0.0
      %478 = vmatpush2.msra.mxu0 0.0
      %479 = vmatprep.subr.mxu0 0.0
      %480 = vmatpush2.msra.mxu0 0.0
      %481 = vmatprep.subr.mxu0 0.0
      %482 = vmatpush2.msra.mxu0 0.0
      %483 = vmatprep.subr.mxu0 0.0
      %484 = vmatpush2.msra.mxu0 0.0
      %485 = vmatprep.subr.mxu0 0.0
      %486 = vmatpush2.msra.mxu0 0.0
      %487 = vmatprep.subr.mxu0 0.0
      %488 = vmatpush2.msra.mxu0 0.0
      %489 = vmatprep.subr.mxu0 0.0
      %490 = vmatpush2.msra.mxu0 0.0
      %491 = vmatprep.subr.mxu0 0.0
      %492 = vmatpush2.msra.mxu0 0.0
      %493 = vmatprep.subr.mxu0 0.0
      %494 = vmatpush2.msra.mxu0 0.0
      %495 = vmatprep.subr.mxu0 0.0
      %496 = vmatpush2.msra.mxu0 0.0
      %497 = vmatprep.mubr.f32.mxu0 0.0
      %498 = vmatmul.mubr.f32.gmra.mxu0 %v413
      %v499 = vpop.f32.mrf.mxu0
      %v500 = vadd.f32 %v308, %v499
      %v501 = vpop.f32.mrf.mxu0
      %v502 = vadd.f32 %v308, %v501
      %503 = vmatprep.mubr.f32.mxu0 0.0
      %504 = vmatmul.mubr.f32.gmra.mxu0 %v416
      %v505 = vpop.f32.mrf.mxu0
      %v506 = vadd.f32 %v313, %v505
      %v507 = vpop.f32.mrf.mxu0
      %v508 = vadd.f32 %v313, %v507
      %509 = vmatprep.mubr.f32.mxu0 0.0
      %510 = vmatmul.mubr.f32.gmra.mxu0 %v419
      %v511 = vpop.f32.mrf.mxu0
      %v512 = vadd.f32 %v318, %v511
      %v513 = vpop.f32.mrf.mxu0
      %v514 = vadd.f32 %v318, %v513
      %515 = vmatprep.mubr.f32.mxu0 0.0
      %516 = vmatmul.mubr.f32.gmra.mxu0 %v422
      %v517 = vpop.f32.mrf.mxu0
      %v518 = vadd.f32 %v323, %v517
      %v519 = vpop.f32.mrf.mxu0
      %v520 = vadd.f32 %v323, %v519
      %521 = vdwg.mxu0
      %522 = vmatprep.subr.mxu0 0.0
      %523 = vmatpush1.msra.mxu0 0.0
      %524 = vmatprep.subr.mxu0 0.0
      %525 = vmatpush1.msra.mxu0 0.0
      %526 = vmatprep.subr.mxu0 0.0
      %527 = vmatpush1.msra.mxu0 0.0
      %528 = vmatprep.subr.mxu0 0.0
      %529 = vmatpush1.msra.mxu0 0.0
      %530 = vmatprep.subr.mxu0 0.0
      %531 = vmatpush1.msra.mxu0 0.0
      %532 = vmatprep.subr.mxu0 0.0
      %533 = vmatpush1.msra.mxu0 0.0
      %534 = vmatprep.subr.mxu0 0.0
      %535 = vmatpush1.msra.mxu0 0.0
      %536 = vmatprep.subr.mxu0 0.0
      %537 = vmatpush1.msra.mxu0 0.0
      %538 = vmatprep.subr.mxu0 0.0
      %539 = vmatpush1.msra.mxu0 0.0
      %540 = vmatprep.subr.mxu0 0.0
      %541 = vmatpush1.msra.mxu0 0.0
      %542 = vmatprep.subr.mxu0 0.0
      %543 = vmatpush1.msra.mxu0 0.0
      %544 = vmatprep.subr.mxu0 0.0
      %545 = vmatpush1.msra.mxu0 0.0
      %546 = vmatprep.subr.mxu0 0.0
      %547 = vmatpush1.msra.mxu0 0.0
      %548 = vmatprep.subr.mxu0 0.0
      %549 = vmatpush1.msra.mxu0 0.0
      %550 = vmatprep.subr.mxu0 0.0
      %551 = vmatpush1.msra.mxu0 0.0
      %552 = vmatprep.subr.mxu0 %v431
      %553 = vmatpush1.msra.mxu0 %v429
      %554 = vmatprep.subr.mxu0 0.0
      %555 = vmatpush2.msra.mxu0 0.0
      %556 = vmatprep.subr.mxu0 0.0
      %557 = vmatpush2.msra.mxu0 0.0
      %558 = vmatprep.subr.mxu0 0.0
      %559 = vmatpush2.msra.mxu0 0.0
      %560 = vmatprep.subr.mxu0 0.0
      %561 = vmatpush2.msra.mxu0 0.0
      %562 = vmatprep.subr.mxu0 0.0
      %563 = vmatpush2.msra.mxu0 0.0
      %564 = vmatprep.subr.mxu0 0.0
      %565 = vmatpush2.msra.mxu0 0.0
      %566 = vmatprep.subr.mxu0 0.0
      %567 = vmatpush2.msra.mxu0 0.0
      %568 = vmatprep.subr.mxu0 0.0
      %569 = vmatpush2.msra.mxu0 0.0
      %570 = vmatprep.subr.mxu0 0.0
      %571 = vmatpush2.msra.mxu0 0.0
      %572 = vmatprep.subr.mxu0 0.0
      %573 = vmatpush2.msra.mxu0 0.0
      %574 = vmatprep.subr.mxu0 0.0
      %575 = vmatpush2.msra.mxu0 0.0
      %576 = vmatprep.subr.mxu0 0.0
      %577 = vmatpush2.msra.mxu0 0.0
      %578 = vmatprep.subr.mxu0 0.0
      %579 = vmatpush2.msra.mxu0 0.0
      %580 = vmatprep.subr.mxu0 0.0
      %581 = vmatpush2.msra.mxu0 0.0
      %582 = vmatprep.subr.mxu0 0.0
      %583 = vmatpush2.msra.mxu0 0.0
      %584 = vmatprep.subr.mxu0 0.0
      %585 = vmatpush2.msra.mxu0 0.0
      %586 = vmatprep.mubr.f32.mxu0 0.0
      %587 = vmatmul.mubr.f32.gmra.mxu0 %v413
      %v588 = vpop.f32.mrf.mxu0
      %v589 = vadd.f32 %v308, %v588
      %v590 = vpop.f32.mrf.mxu0
      %v591 = vadd.f32 %v308, %v590
      %592 = vmatprep.mubr.f32.mxu0 0.0
      %593 = vmatmul.mubr.f32.gmra.mxu0 %v416
      %v594 = vpop.f32.mrf.mxu0
      %v595 = vadd.f32 %v313, %v594
      %v596 = vpop.f32.mrf.mxu0
      %v597 = vadd.f32 %v313, %v596
      %598 = vmatprep.mubr.f32.mxu0 0.0
      %599 = vmatmul.mubr.f32.gmra.mxu0 %v419
      %v600 = vpop.f32.mrf.mxu0
      %v601 = vadd.f32 %v318, %v600
      %v602 = vpop.f32.mrf.mxu0
      %v603 = vadd.f32 %v318, %v602
      %604 = vmatprep.mubr.f32.mxu0 0.0
      %605 = vmatmul.mubr.f32.gmra.mxu0 %v422
      %v606 = vpop.f32.mrf.mxu0
      %v607 = vadd.f32 %v323, %v606
      %v608 = vpop.f32.mrf.mxu0
      %v609 = vadd.f32 %v323, %v608
      %610 = vdwg.mxu0
      %v611 = vtanh.pop %v500
      %v612 = vtanh.pop %v502
      %v613 = vtanh.pop %v589
      %v614 = vtanh.pop %v591
      %v615 = vtanh.pop %v506
      %v616 = vtanh.pop %v508
      %v617 = vtanh.pop %v595
      %v618 = vtanh.pop %v597
      %v619 = vtanh.pop %v512
      %v620 = vtanh.pop %v514
      %v621 = vtanh.pop %v601
      %v622 = vtanh.pop %v603
      %v623 = vtanh.pop %v518
      %v624 = vtanh.pop %v520
      %v625 = vtanh.pop %v607
      %v626 = vtanh.pop %v609
      %vm627 = vcmask 261120
      %v629 = vsel %vm627, %v286, 0
      %v632 = vsel %vm627, %v287, 0
      %v635 = vsel %vm627, %v288, 0
      %v638 = vsel %vm627, %v289, 0
      %640 = vmatprep.subr.mxu0 0.0
      %641 = vmatpush1.msra.mxu0 0.0
      %642 = vmatprep.subr.mxu0 0.0
      %643 = vmatpush1.msra.mxu0 0.0
      %644 = vmatprep.subr.mxu0 0.0
      %645 = vmatpush1.msra.mxu0 0.0
      %646 = vmatprep.subr.mxu0 0.0
      %647 = vmatpush1.msra.mxu0 0.0
      %648 = vmatprep.subr.mxu0 0.0
      %649 = vmatpush1.msra.mxu0 0.0
      %650 = vmatprep.subr.mxu0 0.0
      %651 = vmatpush1.msra.mxu0 0.0
      %652 = vmatprep.subr.mxu0 0.0
      %653 = vmatpush1.msra.mxu0 0.0
      %654 = vmatprep.subr.mxu0 0.0
      %655 = vmatpush1.msra.mxu0 0.0
      %656 = vmatprep.subr.mxu0 0.0
      %657 = vmatpush1.msra.mxu0 0.0
      %658 = vmatprep.subr.mxu0 0.0
      %659 = vmatpush1.msra.mxu0 0.0
      %660 = vmatprep.subr.mxu0 0.0
      %661 = vmatpush1.msra.mxu0 0.0
      %662 = vmatprep.subr.mxu0 0.0
      %663 = vmatpush1.msra.mxu0 0.0
      %664 = vmatprep.subr.mxu0 %v624
      %665 = vmatpush1.msra.mxu0 %v623
      %666 = vmatprep.subr.mxu0 %v620
      %667 = vmatpush1.msra.mxu0 %v619
      %668 = vmatprep.subr.mxu0 %v616
      %669 = vmatpush1.msra.mxu0 %v615
      %670 = vmatprep.subr.mxu0 %v612
      %671 = vmatpush1.msra.mxu0 %v611
      %672 = vmatprep.subr.mxu0 0.0
      %673 = vmatpush2.msra.mxu0 0.0
      %674 = vmatprep.subr.mxu0 0.0
      %675 = vmatpush2.msra.mxu0 0.0
      %676 = vmatprep.subr.mxu0 0.0
      %677 = vmatpush2.msra.mxu0 0.0
      %678 = vmatprep.subr.mxu0 0.0
      %679 = vmatpush2.msra.mxu0 0.0
      %680 = vmatprep.subr.mxu0 0.0
      %681 = vmatpush2.msra.mxu0 0.0
      %682 = vmatprep.subr.mxu0 0.0
      %683 = vmatpush2.msra.mxu0 0.0
      %684 = vmatprep.subr.mxu0 0.0
      %685 = vmatpush2.msra.mxu0 0.0
      %686 = vmatprep.subr.mxu0 0.0
      %687 = vmatpush2.msra.mxu0 0.0
      %688 = vmatprep.subr.mxu0 0.0
      %689 = vmatpush2.msra.mxu0 0.0
      %690 = vmatprep.subr.mxu0 0.0
      %691 = vmatpush2.msra.mxu0 0.0
      %692 = vmatprep.subr.mxu0 0.0
      %693 = vmatpush2.msra.mxu0 0.0
      %694 = vmatprep.subr.mxu0 0.0
      %695 = vmatpush2.msra.mxu0 0.0
      %696 = vmatprep.subr.mxu0 0.0
      %697 = vmatpush2.msra.mxu0 0.0
      %698 = vmatprep.subr.mxu0 0.0
      %699 = vmatpush2.msra.mxu0 0.0
      %700 = vmatprep.subr.mxu0 0.0
      %701 = vmatpush2.msra.mxu0 0.0
      %702 = vmatprep.subr.mxu0 0.0
      %703 = vmatpush2.msra.mxu0 0.0
      %704 = vmatprep.mubr.f32.mxu0 0.0
      %705 = vmatmul.mubr.f32.gmra.mxu0 %v629
      %v706 = vpop.f32.mrf.mxu0
      %v707 = vadd.f32 %v332, %v706
      %v708 = vpop.f32.mrf.mxu0
      %v709 = vadd.f32 %v332, %v708
      %710 = vmatprep.mubr.f32.mxu0 0.0
      %711 = vmatmul.mubr.f32.gmra.mxu0 %v632
      %v712 = vpop.f32.mrf.mxu0
      %v713 = vadd.f32 %v337, %v712
      %v714 = vpop.f32.mrf.mxu0
      %v715 = vadd.f32 %v337, %v714
      %716 = vmatprep.mubr.f32.mxu0 0.0
      %717 = vmatmul.mubr.f32.gmra.mxu0 %v635
      %v718 = vpop.f32.mrf.mxu0
      %v719 = vadd.f32 %v342, %v718
      %v720 = vpop.f32.mrf.mxu0
      %v721 = vadd.f32 %v342, %v720
      %722 = vmatprep.mubr.f32.mxu0 0.0
      %723 = vmatmul.mubr.f32.gmra.mxu0 %v638
      %v724 = vpop.f32.mrf.mxu0
      %v725 = vadd.f32 %v347, %v724
      %v726 = vpop.f32.mrf.mxu0
      %v727 = vadd.f32 %v347, %v726
      %728 = vdwg.mxu0
      %729 = vmatprep.subr.mxu0 0.0
      %730 = vmatpush1.msra.mxu0 0.0
      %731 = vmatprep.subr.mxu0 0.0
      %732 = vmatpush1.msra.mxu0 0.0
      %733 = vmatprep.subr.mxu0 0.0
      %734 = vmatpush1.msra.mxu0 0.0
      %735 = vmatprep.subr.mxu0 0.0
      %736 = vmatpush1.msra.mxu0 0.0
      %737 = vmatprep.subr.mxu0 0.0
      %738 = vmatpush1.msra.mxu0 0.0
      %739 = vmatprep.subr.mxu0 0.0
      %740 = vmatpush1.msra.mxu0 0.0
      %741 = vmatprep.subr.mxu0 0.0
      %742 = vmatpush1.msra.mxu0 0.0
      %743 = vmatprep.subr.mxu0 0.0
      %744 = vmatpush1.msra.mxu0 0.0
      %745 = vmatprep.subr.mxu0 0.0
      %746 = vmatpush1.msra.mxu0 0.0
      %747 = vmatprep.subr.mxu0 0.0
      %748 = vmatpush1.msra.mxu0 0.0
      %749 = vmatprep.subr.mxu0 0.0
      %750 = vmatpush1.msra.mxu0 0.0
      %751 = vmatprep.subr.mxu0 0.0
      %752 = vmatpush1.msra.mxu0 0.0
      %753 = vmatprep.subr.mxu0 %v626
      %754 = vmatpush1.msra.mxu0 %v625
      %755 = vmatprep.subr.mxu0 %v622
      %756 = vmatpush1.msra.mxu0 %v621
      %757 = vmatprep.subr.mxu0 %v618
      %758 = vmatpush1.msra.mxu0 %v617
      %759 = vmatprep.subr.mxu0 %v614
      %760 = vmatpush1.msra.mxu0 %v613
      %761 = vmatprep.subr.mxu0 0.0
      %762 = vmatpush2.msra.mxu0 0.0
      %763 = vmatprep.subr.mxu0 0.0
      %764 = vmatpush2.msra.mxu0 0.0
      %765 = vmatprep.subr.mxu0 0.0
      %766 = vmatpush2.msra.mxu0 0.0
      %767 = vmatprep.subr.mxu0 0.0
      %768 = vmatpush2.msra.mxu0 0.0
      %769 = vmatprep.subr.mxu0 0.0
      %770 = vmatpush2.msra.mxu0 0.0
      %771 = vmatprep.subr.mxu0 0.0
      %772 = vmatpush2.msra.mxu0 0.0
      %773 = vmatprep.subr.mxu0 0.0
      %774 = vmatpush2.msra.mxu0 0.0
      %775 = vmatprep.subr.mxu0 0.0
      %776 = vmatpush2.msra.mxu0 0.0
      %777 = vmatprep.subr.mxu0 0.0
      %778 = vmatpush2.msra.mxu0 0.0
      %779 = vmatprep.subr.mxu0 0.0
      %780 = vmatpush2.msra.mxu0 0.0
      %781 = vmatprep.subr.mxu0 0.0
      %782 = vmatpush2.msra.mxu0 0.0
      %783 = vmatprep.subr.mxu0 0.0
      %784 = vmatpush2.msra.mxu0 0.0
      %785 = vmatprep.subr.mxu0 0.0
      %786 = vmatpush2.msra.mxu0 0.0
      %787 = vmatprep.subr.mxu0 0.0
      %788 = vmatpush2.msra.mxu0 0.0
      %789 = vmatprep.subr.mxu0 0.0
      %790 = vmatpush2.msra.mxu0 0.0
      %791 = vmatprep.subr.mxu0 0.0
      %792 = vmatpush2.msra.mxu0 0.0
      %793 = vmatprep.mubr.f32.mxu0 0.0
      %794 = vmatmul.mubr.f32.gmra.mxu0 %v629
      %v795 = vpop.f32.mrf.mxu0
      %v796 = vadd.f32 %v332, %v795
      %v797 = vpop.f32.mrf.mxu0
      %v798 = vadd.f32 %v332, %v797
      %799 = vmatprep.mubr.f32.mxu0 0.0
      %800 = vmatmul.mubr.f32.gmra.mxu0 %v632
      %v801 = vpop.f32.mrf.mxu0
      %v802 = vadd.f32 %v337, %v801
      %v803 = vpop.f32.mrf.mxu0
      %v804 = vadd.f32 %v337, %v803
      %805 = vmatprep.mubr.f32.mxu0 0.0
      %806 = vmatmul.mubr.f32.gmra.mxu0 %v635
      %v807 = vpop.f32.mrf.mxu0
      %v808 = vadd.f32 %v342, %v807
      %v809 = vpop.f32.mrf.mxu0
      %v810 = vadd.f32 %v342, %v809
      %811 = vmatprep.mubr.f32.mxu0 0.0
      %812 = vmatmul.mubr.f32.gmra.mxu0 %v638
      %v813 = vpop.f32.mrf.mxu0
      %v814 = vadd.f32 %v347, %v813
      %v815 = vpop.f32.mrf.mxu0
      %v816 = vadd.f32 %v347, %v815
      %817 = vdwg.mxu0
      %v818 = vtanh.pop %v707
      %v819 = vtanh.pop %v709
      %v820 = vtanh.pop %v796
      %v821 = vtanh.pop %v798
      %v822 = vtanh.pop %v713
      %v823 = vtanh.pop %v715
      %v824 = vtanh.pop %v802
      %v825 = vtanh.pop %v804
      %v826 = vtanh.pop %v719
      %v827 = vtanh.pop %v721
      %v828 = vtanh.pop %v808
      %v829 = vtanh.pop %v810
      %v830 = vtanh.pop %v725
      %v831 = vtanh.pop %v727
      %v832 = vtanh.pop %v814
      %v833 = vtanh.pop %v816
      %v835 = vsel %vm627, %v291, 0
      %v838 = vsel %vm627, %v292, 0
      %v841 = vsel %vm627, %v293, 0
      %v844 = vsel %vm627, %v294, 0
      %846 = vmatprep.subr.mxu0 0.0
      %847 = vmatpush1.msra.mxu0 0.0
      %848 = vmatprep.subr.mxu0 0.0
      %849 = vmatpush1.msra.mxu0 0.0
      %850 = vmatprep.subr.mxu0 0.0
      %851 = vmatpush1.msra.mxu0 0.0
      %852 = vmatprep.subr.mxu0 0.0
      %853 = vmatpush1.msra.mxu0 0.0
      %854 = vmatprep.subr.mxu0 0.0
      %855 = vmatpush1.msra.mxu0 0.0
      %856 = vmatprep.subr.mxu0 0.0
      %857 = vmatpush1.msra.mxu0 0.0
      %858 = vmatprep.subr.mxu0 0.0
      %859 = vmatpush1.msra.mxu0 0.0
      %860 = vmatprep.subr.mxu0 0.0
      %861 = vmatpush1.msra.mxu0 0.0
      %862 = vmatprep.subr.mxu0 0.0
      %863 = vmatpush1.msra.mxu0 0.0
      %864 = vmatprep.subr.mxu0 0.0
      %865 = vmatpush1.msra.mxu0 0.0
      %866 = vmatprep.subr.mxu0 0.0
      %867 = vmatpush1.msra.mxu0 0.0
      %868 = vmatprep.subr.mxu0 0.0
      %869 = vmatpush1.msra.mxu0 0.0
      %870 = vmatprep.subr.mxu0 %v831
      %871 = vmatpush1.msra.mxu0 %v830
      %872 = vmatprep.subr.mxu0 %v827
      %873 = vmatpush1.msra.mxu0 %v826
      %874 = vmatprep.subr.mxu0 %v823
      %875 = vmatpush1.msra.mxu0 %v822
      %876 = vmatprep.subr.mxu0 %v819
      %877 = vmatpush1.msra.mxu0 %v818
      %878 = vmatprep.subr.mxu0 0.0
      %879 = vmatpush2.msra.mxu0 0.0
      %880 = vmatprep.subr.mxu0 0.0
      %881 = vmatpush2.msra.mxu0 0.0
      %882 = vmatprep.subr.mxu0 0.0
      %883 = vmatpush2.msra.mxu0 0.0
      %884 = vmatprep.subr.mxu0 0.0
      %885 = vmatpush2.msra.mxu0 0.0
      %886 = vmatprep.subr.mxu0 0.0
      %887 = vmatpush2.msra.mxu0 0.0
      %888 = vmatprep.subr.mxu0 0.0
      %889 = vmatpush2.msra.mxu0 0.0
      %890 = vmatprep.subr.mxu0 0.0
      %891 = vmatpush2.msra.mxu0 0.0
      %892 = vmatprep.subr.mxu0 0.0
      %893 = vmatpush2.msra.mxu0 0.0
      %894 = vmatprep.subr.mxu0 0.0
      %895 = vmatpush2.msra.mxu0 0.0
      %896 = vmatprep.subr.mxu0 0.0
      %897 = vmatpush2.msra.mxu0 0.0
      %898 = vmatprep.subr.mxu0 0.0
      %899 = vmatpush2.msra.mxu0 0.0
      %900 = vmatprep.subr.mxu0 0.0
      %901 = vmatpush2.msra.mxu0 0.0
      %902 = vmatprep.subr.mxu0 0.0
      %903 = vmatpush2.msra.mxu0 0.0
      %904 = vmatprep.subr.mxu0 0.0
      %905 = vmatpush2.msra.mxu0 0.0
      %906 = vmatprep.subr.mxu0 0.0
      %907 = vmatpush2.msra.mxu0 0.0
      %908 = vmatprep.subr.mxu0 0.0
      %909 = vmatpush2.msra.mxu0 0.0
      %910 = vmatprep.mubr.f32.mxu0 0.0
      %911 = vmatmul.mubr.f32.gmra.mxu0 %v835
      %v912 = vpop.f32.mrf.mxu0
      %v913 = vadd.f32 %v357, %v912
      %v914 = vpop.f32.mrf.mxu0
      %v915 = vadd.f32 %v357, %v914
      %916 = vmatprep.mubr.f32.mxu0 0.0
      %917 = vmatmul.mubr.f32.gmra.mxu0 %v838
      %v918 = vpop.f32.mrf.mxu0
      %v919 = vadd.f32 %v362, %v918
      %v920 = vpop.f32.mrf.mxu0
      %v921 = vadd.f32 %v362, %v920
      %922 = vmatprep.mubr.f32.mxu0 0.0
      %923 = vmatmul.mubr.f32.gmra.mxu0 %v841
      %v924 = vpop.f32.mrf.mxu0
      %v925 = vadd.f32 %v367, %v924
      %v926 = vpop.f32.mrf.mxu0
      %v927 = vadd.f32 %v367, %v926
      %928 = vmatprep.mubr.f32.mxu0 0.0
      %929 = vmatmul.mubr.f32.gmra.mxu0 %v844
      %v930 = vpop.f32.mrf.mxu0
      %v931 = vadd.f32 %v372, %v930
      %v932 = vpop.f32.mrf.mxu0
      %v933 = vadd.f32 %v372, %v932
      %934 = vdwg.mxu0
      %935 = vmatprep.subr.mxu0 0.0
      %936 = vmatpush1.msra.mxu0 0.0
      %937 = vmatprep.subr.mxu0 0.0
      %938 = vmatpush1.msra.mxu0 0.0
      %939 = vmatprep.subr.mxu0 0.0
      %940 = vmatpush1.msra.mxu0 0.0
      %941 = vmatprep.subr.mxu0 0.0
      %942 = vmatpush1.msra.mxu0 0.0
      %943 = vmatprep.subr.mxu0 0.0
      %944 = vmatpush1.msra.mxu0 0.0
      %945 = vmatprep.subr.mxu0 0.0
      %946 = vmatpush1.msra.mxu0 0.0
      %947 = vmatprep.subr.mxu0 0.0
      %948 = vmatpush1.msra.mxu0 0.0
      %949 = vmatprep.subr.mxu0 0.0
      %950 = vmatpush1.msra.mxu0 0.0
      %951 = vmatprep.subr.mxu0 0.0
      %952 = vmatpush1.msra.mxu0 0.0
      %953 = vmatprep.subr.mxu0 0.0
      %954 = vmatpush1.msra.mxu0 0.0
      %955 = vmatprep.subr.mxu0 0.0
      %956 = vmatpush1.msra.mxu0 0.0
      %957 = vmatprep.subr.mxu0 0.0
      %958 = vmatpush1.msra.mxu0 0.0
      %959 = vmatprep.subr.mxu0 %v833
      %960 = vmatpush1.msra.mxu0 %v832
      %961 = vmatprep.subr.mxu0 %v829
      %962 = vmatpush1.msra.mxu0 %v828
      %963 = vmatprep.subr.mxu0 %v825
      %964 = vmatpush1.msra.mxu0 %v824
      %965 = vmatprep.subr.mxu0 %v821
      %966 = vmatpush1.msra.mxu0 %v820
      %967 = vmatprep.subr.mxu0 0.0
      %968 = vmatpush2.msra.mxu0 0.0
      %969 = vmatprep.subr.mxu0 0.0
      %970 = vmatpush2.msra.mxu0 0.0
      %971 = vmatprep.subr.mxu0 0.0
      %972 = vmatpush2.msra.mxu0 0.0
      %973 = vmatprep.subr.mxu0 0.0
      %974 = vmatpush2.msra.mxu0 0.0
      %975 = vmatprep.subr.mxu0 0.0
      %976 = vmatpush2.msra.mxu0 0.0
      %977 = vmatprep.subr.mxu0 0.0
      %978 = vmatpush2.msra.mxu0 0.0
      %979 = vmatprep.subr.mxu0 0.0
      %980 = vmatpush2.msra.mxu0 0.0
      %981 = vmatprep.subr.mxu0 0.0
      %982 = vmatpush2.msra.mxu0 0.0
      %983 = vmatprep.subr.mxu0 0.0
      %984 = vmatpush2.msra.mxu0 0.0
      %985 = vmatprep.subr.mxu0 0.0
      %986 = vmatpush2.msra.mxu0 0.0
      %987 = vmatprep.subr.mxu0 0.0
      %988 = vmatpush2.msra.mxu0 0.0
      %989 = vmatprep.subr.mxu0 0.0
      %990 = vmatpush2.msra.mxu0 0.0
      %991 = vmatprep.subr.mxu0 0.0
      %992 = vmatpush2.msra.mxu0 0.0
      %993 = vmatprep.subr.mxu0 0.0
      %994 = vmatpush2.msra.mxu0 0.0
      %995 = vmatprep.subr.mxu0 0.0
      %996 = vmatpush2.msra.mxu0 0.0
      %997 = vmatprep.subr.mxu0 0.0
      %998 = vmatpush2.msra.mxu0 0.0
      %999 = vmatprep.mubr.f32.mxu0 0.0
      %1000 = vmatmul.mubr.f32.gmra.mxu0 %v835
      %v1001 = vpop.f32.mrf.mxu0
      %v1002 = vadd.f32 %v357, %v1001
      %v1003 = vpop.f32.mrf.mxu0
      %v1004 = vadd.f32 %v357, %v1003
      %1005 = vmatprep.mubr.f32.mxu0 0.0
      %1006 = vmatmul.mubr.f32.gmra.mxu0 %v838
      %v1007 = vpop.f32.mrf.mxu0
      %v1008 = vadd.f32 %v362, %v1007
      %v1009 = vpop.f32.mrf.mxu0
      %v1010 = vadd.f32 %v362, %v1009
      %1011 = vmatprep.mubr.f32.mxu0 0.0
      %1012 = vmatmul.mubr.f32.gmra.mxu0 %v841
      %v1013 = vpop.f32.mrf.mxu0
      %v1014 = vadd.f32 %v367, %v1013
      %v1015 = vpop.f32.mrf.mxu0
      %v1016 = vadd.f32 %v367, %v1015
      %1017 = vmatprep.mubr.f32.mxu0 0.0
      %1018 = vmatmul.mubr.f32.gmra.mxu0 %v844
      %v1019 = vpop.f32.mrf.mxu0
      %v1020 = vadd.f32 %v372, %v1019
      %v1021 = vpop.f32.mrf.mxu0
      %v1022 = vadd.f32 %v372, %v1021
      %1023 = vdwg.mxu0
      %v1024 = vtanh.pop %v913
      %v1025 = vtanh.pop %v915
      %v1026 = vtanh.pop %v1002
      %v1027 = vtanh.pop %v1004
      %v1028 = vtanh.pop %v919
      %v1029 = vtanh.pop %v921
      %v1030 = vtanh.pop %v1008
      %v1031 = vtanh.pop %v1010
      %v1032 = vtanh.pop %v925
      %v1033 = vtanh.pop %v927
      %v1034 = vtanh.pop %v1014
      %v1035 = vtanh.pop %v1016
      %v1036 = vtanh.pop %v931
      %v1037 = vtanh.pop %v933
      %v1038 = vtanh.pop %v1020
      %v1039 = vtanh.pop %v1022
      %v1041 = vsel %vm627, %v296, 0
      %v1044 = vsel %vm627, %v297, 0
      %v1047 = vsel %vm627, %v298, 0
      %v1050 = vsel %vm627, %v299, 0
      %1052 = vmatprep.subr.mxu0 0.0
      %1053 = vmatpush1.msra.mxu0 0.0
      %1054 = vmatprep.subr.mxu0 0.0
      %1055 = vmatpush1.msra.mxu0 0.0
      %1056 = vmatprep.subr.mxu0 0.0
      %1057 = vmatpush1.msra.mxu0 0.0
      %1058 = vmatprep.subr.mxu0 0.0
      %1059 = vmatpush1.msra.mxu0 0.0
      %1060 = vmatprep.subr.mxu0 0.0
      %1061 = vmatpush1.msra.mxu0 0.0
      %1062 = vmatprep.subr.mxu0 0.0
      %1063 = vmatpush1.msra.mxu0 0.0
      %1064 = vmatprep.subr.mxu0 0.0
      %1065 = vmatpush1.msra.mxu0 0.0
      %1066 = vmatprep.subr.mxu0 0.0
      %1067 = vmatpush1.msra.mxu0 0.0
      %1068 = vmatprep.subr.mxu0 0.0
      %1069 = vmatpush1.msra.mxu0 0.0
      %1070 = vmatprep.subr.mxu0 0.0
      %1071 = vmatpush1.msra.mxu0 0.0
      %1072 = vmatprep.subr.mxu0 0.0
      %1073 = vmatpush1.msra.mxu0 0.0
      %1074 = vmatprep.subr.mxu0 0.0
      %1075 = vmatpush1.msra.mxu0 0.0
      %1076 = vmatprep.subr.mxu0 %v1037
      %1077 = vmatpush1.msra.mxu0 %v1036
      %1078 = vmatprep.subr.mxu0 %v1033
      %1079 = vmatpush1.msra.mxu0 %v1032
      %1080 = vmatprep.subr.mxu0 %v1029
      %1081 = vmatpush1.msra.mxu0 %v1028
      %1082 = vmatprep.subr.mxu0 %v1025
      %1083 = vmatpush1.msra.mxu0 %v1024
      %1084 = vmatprep.subr.mxu0 0.0
      %1085 = vmatpush2.msra.mxu0 0.0
      %1086 = vmatprep.subr.mxu0 0.0
      %1087 = vmatpush2.msra.mxu0 0.0
      %1088 = vmatprep.subr.mxu0 0.0
      %1089 = vmatpush2.msra.mxu0 0.0
      %1090 = vmatprep.subr.mxu0 0.0
      %1091 = vmatpush2.msra.mxu0 0.0
      %1092 = vmatprep.subr.mxu0 0.0
      %1093 = vmatpush2.msra.mxu0 0.0
      %1094 = vmatprep.subr.mxu0 0.0
      %1095 = vmatpush2.msra.mxu0 0.0
      %1096 = vmatprep.subr.mxu0 0.0
      %1097 = vmatpush2.msra.mxu0 0.0
      %1098 = vmatprep.subr.mxu0 0.0
      %1099 = vmatpush2.msra.mxu0 0.0
      %1100 = vmatprep.subr.mxu0 0.0
      %1101 = vmatpush2.msra.mxu0 0.0
      %1102 = vmatprep.subr.mxu0 0.0
      %1103 = vmatpush2.msra.mxu0 0.0
      %1104 = vmatprep.subr.mxu0 0.0
      %1105 = vmatpush2.msra.mxu0 0.0
      %1106 = vmatprep.subr.mxu0 0.0
      %1107 = vmatpush2.msra.mxu0 0.0
      %1108 = vmatprep.subr.mxu0 0.0
      %1109 = vmatpush2.msra.mxu0 0.0
      %1110 = vmatprep.subr.mxu0 0.0
      %1111 = vmatpush2.msra.mxu0 0.0
      %1112 = vmatprep.subr.mxu0 0.0
      %1113 = vmatpush2.msra.mxu0 0.0
      %1114 = vmatprep.subr.mxu0 0.0
      %1115 = vmatpush2.msra.mxu0 0.0
      %1116 = vmatprep.mubr.f32.mxu0 0.0
      %1117 = vmatmul.mubr.f32.gmra.mxu0 %v1041
      %v1118 = vpop.f32.mrf.mxu0
      %v1119 = vadd.f32 %v382, %v1118
      %v1120 = vpop.f32.mrf.mxu0
      %v1121 = vadd.f32 %v382, %v1120
      %1122 = vmatprep.mubr.f32.mxu0 0.0
      %1123 = vmatmul.mubr.f32.gmra.mxu0 %v1044
      %v1124 = vpop.f32.mrf.mxu0
      %v1125 = vadd.f32 %v387, %v1124
      %v1126 = vpop.f32.mrf.mxu0
      %v1127 = vadd.f32 %v387, %v1126
      %1128 = vmatprep.mubr.f32.mxu0 0.0
      %1129 = vmatmul.mubr.f32.gmra.mxu0 %v1047
      %v1130 = vpop.f32.mrf.mxu0
      %v1131 = vadd.f32 %v392, %v1130
      %v1132 = vpop.f32.mrf.mxu0
      %v1133 = vadd.f32 %v392, %v1132
      %1134 = vmatprep.mubr.f32.mxu0 0.0
      %1135 = vmatmul.mubr.f32.gmra.mxu0 %v1050
      %v1136 = vpop.f32.mrf.mxu0
      %v1137 = vadd.f32 %v397, %v1136
      %v1138 = vpop.f32.mrf.mxu0
      %v1139 = vadd.f32 %v397, %v1138
      %1140 = vdwg.mxu0
      %1141 = vmatprep.subr.mxu0 0.0
      %1142 = vmatpush1.msra.mxu0 0.0
      %1143 = vmatprep.subr.mxu0 0.0
      %1144 = vmatpush1.msra.mxu0 0.0
      %1145 = vmatprep.subr.mxu0 0.0
      %1146 = vmatpush1.msra.mxu0 0.0
      %1147 = vmatprep.subr.mxu0 0.0
      %1148 = vmatpush1.msra.mxu0 0.0
      %1149 = vmatprep.subr.mxu0 0.0
      %1150 = vmatpush1.msra.mxu0 0.0
      %1151 = vmatprep.subr.mxu0 0.0
      %1152 = vmatpush1.msra.mxu0 0.0
      %1153 = vmatprep.subr.mxu0 0.0
      %1154 = vmatpush1.msra.mxu0 0.0
      %1155 = vmatprep.subr.mxu0 0.0
      %1156 = vmatpush1.msra.mxu0 0.0
      %1157 = vmatprep.subr.mxu0 0.0
      %1158 = vmatpush1.msra.mxu0 0.0
      %1159 = vmatprep.subr.mxu0 0.0
      %1160 = vmatpush1.msra.mxu0 0.0
      %1161 = vmatprep.subr.mxu0 0.0
      %1162 = vmatpush1.msra.mxu0 0.0
      %1163 = vmatprep.subr.mxu0 0.0
      %1164 = vmatpush1.msra.mxu0 0.0
      %1165 = vmatprep.subr.mxu0 %v1039
      %1166 = vmatpush1.msra.mxu0 %v1038
      %1167 = vmatprep.subr.mxu0 %v1035
      %1168 = vmatpush1.msra.mxu0 %v1034
      %1169 = vmatprep.subr.mxu0 %v1031
      %1170 = vmatpush1.msra.mxu0 %v1030
      %1171 = vmatprep.subr.mxu0 %v1027
      %1172 = vmatpush1.msra.mxu0 %v1026
      %1173 = vmatprep.subr.mxu0 0.0
      %1174 = vmatpush2.msra.mxu0 0.0
      %1175 = vmatprep.subr.mxu0 0.0
      %1176 = vmatpush2.msra.mxu0 0.0
      %1177 = vmatprep.subr.mxu0 0.0
      %1178 = vmatpush2.msra.mxu0 0.0
      %1179 = vmatprep.subr.mxu0 0.0
      %1180 = vmatpush2.msra.mxu0 0.0
      %1181 = vmatprep.subr.mxu0 0.0
      %1182 = vmatpush2.msra.mxu0 0.0
      %1183 = vmatprep.subr.mxu0 0.0
      %1184 = vmatpush2.msra.mxu0 0.0
      %1185 = vmatprep.subr.mxu0 0.0
      %1186 = vmatpush2.msra.mxu0 0.0
      %1187 = vmatprep.subr.mxu0 0.0
      %1188 = vmatpush2.msra.mxu0 0.0
      %1189 = vmatprep.subr.mxu0 0.0
      %1190 = vmatpush2.msra.mxu0 0.0
      %1191 = vmatprep.subr.mxu0 0.0
      %1192 = vmatpush2.msra.mxu0 0.0
      %1193 = vmatprep.subr.mxu0 0.0
      %1194 = vmatpush2.msra.mxu0 0.0
      %1195 = vmatprep.subr.mxu0 0.0
      %1196 = vmatpush2.msra.mxu0 0.0
      %1197 = vmatprep.subr.mxu0 0.0
      %1198 = vmatpush2.msra.mxu0 0.0
      %1199 = vmatprep.subr.mxu0 0.0
      %1200 = vmatpush2.msra.mxu0 0.0
      %1201 = vmatprep.subr.mxu0 0.0
      %1202 = vmatpush2.msra.mxu0 0.0
      %1203 = vmatprep.subr.mxu0 0.0
      %1204 = vmatpush2.msra.mxu0 0.0
      %1205 = vmatprep.mubr.f32.mxu0 0.0
      %1206 = vmatmul.mubr.f32.gmra.mxu0 %v1041
      %v1207 = vpop.f32.mrf.mxu0
      %v1208 = vadd.f32 %v382, %v1207
      %v1209 = vpop.f32.mrf.mxu0
      %v1210 = vadd.f32 %v382, %v1209
      %1211 = vmatprep.mubr.f32.mxu0 0.0
      %1212 = vmatmul.mubr.f32.gmra.mxu0 %v1044
      %v1213 = vpop.f32.mrf.mxu0
      %v1214 = vadd.f32 %v387, %v1213
      %v1215 = vpop.f32.mrf.mxu0
      %v1216 = vadd.f32 %v387, %v1215
      %1217 = vmatprep.mubr.f32.mxu0 0.0
      %1218 = vmatmul.mubr.f32.gmra.mxu0 %v1047
      %v1219 = vpop.f32.mrf.mxu0
      %v1220 = vadd.f32 %v392, %v1219
      %v1221 = vpop.f32.mrf.mxu0
      %v1222 = vadd.f32 %v392, %v1221
      %1223 = vmatprep.mubr.f32.mxu0 0.0
      %1224 = vmatmul.mubr.f32.gmra.mxu0 %v1050
      %v1225 = vpop.f32.mrf.mxu0
      %v1226 = vadd.f32 %v397, %v1225
      %v1227 = vpop.f32.mrf.mxu0
      %v1228 = vadd.f32 %v397, %v1227
      %1229 = vdwg.mxu0
      %v1230 = vtanh.pop %v1119
      %v1231 = vtanh.pop %v1121
      %v1232 = vtanh.pop %v1208
      %v1233 = vtanh.pop %v1210
      %v1234 = vtanh.pop %v1125
      %v1235 = vtanh.pop %v1127
      %v1236 = vtanh.pop %v1214
      %v1237 = vtanh.pop %v1216
      %v1238 = vtanh.pop %v1131
      %v1239 = vtanh.pop %v1133
      %v1240 = vtanh.pop %v1220
      %v1241 = vtanh.pop %v1222
      %v1242 = vtanh.pop %v1137
      %v1243 = vtanh.pop %v1139
      %v1244 = vtanh.pop %v1226
      %v1245 = vtanh.pop %v1228
      %v1247 = vsel %vm627, %v300, 0
      %1249 = vmatprep.subr.mxu0 0.0
      %1250 = vmatpush1.msra.mxu0 0.0
      %1251 = vmatprep.subr.mxu0 0.0
      %1252 = vmatpush1.msra.mxu0 0.0
      %1253 = vmatprep.subr.mxu0 0.0
      %1254 = vmatpush1.msra.mxu0 0.0
      %1255 = vmatprep.subr.mxu0 0.0
      %1256 = vmatpush1.msra.mxu0 0.0
      %1257 = vmatprep.subr.mxu0 0.0
      %1258 = vmatpush1.msra.mxu0 0.0
      %1259 = vmatprep.subr.mxu0 0.0
      %1260 = vmatpush1.msra.mxu0 0.0
      %1261 = vmatprep.subr.mxu0 0.0
      %1262 = vmatpush1.msra.mxu0 0.0
      %1263 = vmatprep.subr.mxu0 0.0
      %1264 = vmatpush1.msra.mxu0 0.0
      %1265 = vmatprep.subr.mxu0 0.0
      %1266 = vmatpush1.msra.mxu0 0.0
      %1267 = vmatprep.subr.mxu0 0.0
      %1268 = vmatpush1.msra.mxu0 0.0
      %1269 = vmatprep.subr.mxu0 0.0
      %1270 = vmatpush1.msra.mxu0 0.0
      %1271 = vmatprep.subr.mxu0 0.0
      %1272 = vmatpush1.msra.mxu0 0.0
      %1273 = vmatprep.subr.mxu0 %v1243
      %1274 = vmatpush1.msra.mxu0 %v1242
      %1275 = vmatprep.subr.mxu0 %v1239
      %1276 = vmatpush1.msra.mxu0 %v1238
      %1277 = vmatprep.subr.mxu0 %v1235
      %1278 = vmatpush1.msra.mxu0 %v1234
      %1279 = vmatprep.subr.mxu0 %v1231
      %1280 = vmatpush1.msra.mxu0 %v1230
      %1281 = vmatprep.subr.mxu0 0.0
      %1282 = vmatpush2.msra.mxu0 0.0
      %1283 = vmatprep.subr.mxu0 0.0
      %1284 = vmatpush2.msra.mxu0 0.0
      %1285 = vmatprep.subr.mxu0 0.0
      %1286 = vmatpush2.msra.mxu0 0.0
      %1287 = vmatprep.subr.mxu0 0.0
      %1288 = vmatpush2.msra.mxu0 0.0
      %1289 = vmatprep.subr.mxu0 0.0
      %1290 = vmatpush2.msra.mxu0 0.0
      %1291 = vmatprep.subr.mxu0 0.0
      %1292 = vmatpush2.msra.mxu0 0.0
      %1293 = vmatprep.subr.mxu0 0.0
      %1294 = vmatpush2.msra.mxu0 0.0
      %1295 = vmatprep.subr.mxu0 0.0
      %1296 = vmatpush2.msra.mxu0 0.0
      %1297 = vmatprep.subr.mxu0 0.0
      %1298 = vmatpush2.msra.mxu0 0.0
      %1299 = vmatprep.subr.mxu0 0.0
      %1300 = vmatpush2.msra.mxu0 0.0
      %1301 = vmatprep.subr.mxu0 0.0
      %1302 = vmatpush2.msra.mxu0 0.0
      %1303 = vmatprep.subr.mxu0 0.0
      %1304 = vmatpush2.msra.mxu0 0.0
      %1305 = vmatprep.subr.mxu0 0.0
      %1306 = vmatpush2.msra.mxu0 0.0
      %1307 = vmatprep.subr.mxu0 0.0
      %1308 = vmatpush2.msra.mxu0 0.0
      %1309 = vmatprep.subr.mxu0 0.0
      %1310 = vmatpush2.msra.mxu0 0.0
      %1311 = vmatprep.subr.mxu0 0.0
      %1312 = vmatpush2.msra.mxu0 0.0
      %1313 = vmatprep.mubr.f32.mxu0 0.0
      %1314 = vmatmul.mubr.f32.gmra.mxu0 %v1247
      %v1315 = vpop.f32.mrf.mxu0
      %v1316 = vadd.f32 %v403, %v1315
      %v1317 = vpop.f32.mrf.mxu0
      %v1318 = vadd.f32 %v403, %v1317
      %1319 = vdwg.mxu0
      %1320 = vmatprep.subr.mxu0 0.0
      %1321 = vmatpush1.msra.mxu0 0.0
      %1322 = vmatprep.subr.mxu0 0.0
      %1323 = vmatpush1.msra.mxu0 0.0
      %1324 = vmatprep.subr.mxu0 0.0
      %1325 = vmatpush1.msra.mxu0 0.0
      %1326 = vmatprep.subr.mxu0 0.0
      %1327 = vmatpush1.msra.mxu0 0.0
      %1328 = vmatprep.subr.mxu0 0.0
      %1329 = vmatpush1.msra.mxu0 0.0
      %1330 = vmatprep.subr.mxu0 0.0
      %1331 = vmatpush1.msra.mxu0 0.0
      %1332 = vmatprep.subr.mxu0 0.0
      %1333 = vmatpush1.msra.mxu0 0.0
      %1334 = vmatprep.subr.mxu0 0.0
      %1335 = vmatpush1.msra.mxu0 0.0
      %1336 = vmatprep.subr.mxu0 0.0
      %1337 = vmatpush1.msra.mxu0 0.0
      %1338 = vmatprep.subr.mxu0 0.0
      %1339 = vmatpush1.msra.mxu0 0.0
      %1340 = vmatprep.subr.mxu0 0.0
      %1341 = vmatpush1.msra.mxu0 0.0
      %1342 = vmatprep.subr.mxu0 0.0
      %1343 = vmatpush1.msra.mxu0 0.0
      %1344 = vmatprep.subr.mxu0 %v1245
      %1345 = vmatpush1.msra.mxu0 %v1244
      %1346 = vmatprep.subr.mxu0 %v1241
      %1347 = vmatpush1.msra.mxu0 %v1240
      %1348 = vmatprep.subr.mxu0 %v1237
      %1349 = vmatpush1.msra.mxu0 %v1236
      %1350 = vmatprep.subr.mxu0 %v1233
      %1351 = vmatpush1.msra.mxu0 %v1232
      %1352 = vmatprep.subr.mxu0 0.0
      %1353 = vmatpush2.msra.mxu0 0.0
      %1354 = vmatprep.subr.mxu0 0.0
      %1355 = vmatpush2.msra.mxu0 0.0
      %1356 = vmatprep.subr.mxu0 0.0
      %1357 = vmatpush2.msra.mxu0 0.0
      %1358 = vmatprep.subr.mxu0 0.0
      %1359 = vmatpush2.msra.mxu0 0.0
      %1360 = vmatprep.subr.mxu0 0.0
      %1361 = vmatpush2.msra.mxu0 0.0
      %1362 = vmatprep.subr.mxu0 0.0
      %1363 = vmatpush2.msra.mxu0 0.0
      %1364 = vmatprep.subr.mxu0 0.0
      %1365 = vmatpush2.msra.mxu0 0.0
      %1366 = vmatprep.subr.mxu0 0.0
      %1367 = vmatpush2.msra.mxu0 0.0
      %1368 = vmatprep.subr.mxu0 0.0
      %1369 = vmatpush2.msra.mxu0 0.0
      %1370 = vmatprep.subr.mxu0 0.0
      %1371 = vmatpush2.msra.mxu0 0.0
      %1372 = vmatprep.subr.mxu0 0.0
      %1373 = vmatpush2.msra.mxu0 0.0
      %1374 = vmatprep.subr.mxu0 0.0
      %1375 = vmatpush2.msra.mxu0 0.0
      %1376 = vmatprep.subr.mxu0 0.0
      %1377 = vmatpush2.msra.mxu0 0.0
      %1378 = vmatprep.subr.mxu0 0.0
      %1379 = vmatpush2.msra.mxu0 0.0
      %1380 = vmatprep.subr.mxu0 0.0
      %1381 = vmatpush2.msra.mxu0 0.0
      %1382 = vmatprep.subr.mxu0 0.0
      %1383 = vmatpush2.msra.mxu0 0.0
      %1384 = vmatprep.mubr.f32.mxu0 0.0
      %1385 = vmatmul.mubr.f32.gmra.mxu0 %v1247
      %v1386 = vpop.f32.mrf.mxu0
      %v1387 = vadd.f32 %v403, %v1386
      %v1388 = vpop.f32.mrf.mxu0
      %v1389 = vadd.f32 %v403, %v1388
      %1390 = vdwg.mxu0
      %v1395 = vcombine.low %v1316, %v1318
      %v1396 = vcombine.low %v1387, %v1389
      %v1398 = vunpack.c.l.s4 1983009808
      %v1399 = vunpack.c.0.s8 %v1398
      %v1400 = vlaneseq
      %v1401 = vshrl.u32 %v1400, 7
      %v1402 = vsub.s32 %v1399, %v1401
      %v1403 = vrot.slane %v1395, %v1402
      %v1405 = vunpack.c.l.s4 1983009808
      %v1406 = vunpack.c.0.s8 %v1405
      %v1407 = vlaneseq
      %v1408 = vshrl.u32 %v1407, 7
      %v1409 = vsub.s32 %v1406, %v1408
      %v1410 = vrot.slane %v1396, %v1409
      %v1411 = vcombine.low %v1403, %v1410
      %1413 = vst [vmem:[%s280] sm:$0xff] %v1411
      %s1414 = smul.u32 4, %s18
      %p1415 = scmp.lt.s32.totalorder %s1414, 15
      %s1416 = scalar_select %p1415, %s1414, 15
      %s1417 = smul.addr %s1416, 2
      %s1418 = scalar_lea.vmem %s7, %s1417
      // Predicated region
      $region49: #{pinns_forward.1} parent=47 // pred_check
        %p1419 = pneg %p188
      $region50: #{pinns_forward.1} parent=47 // pred_check_branch
        %1421 = sbr.rel (%p1419) target = $region52
      $region51: #{pinns_forward.1} parent=47 // pred_region
        %s1422 = smul.u32 4, %s18
      $region52: #{pinns_forward.1} parent=47 // pred_fallthru
        _
    $region48: #{pinns_forward.1} parent=5 // pred_fallthru
      _
    %p1423 = scmp.le.s32.totalorder 2, %s13
    // Predicated region
    $region53: #{pinns_forward.1} parent=5 // pred_check
      %p1424 = pneg %p1423
    $region54: #{pinns_forward.1} parent=5 // pred_check_branch
      %1426 = sbr.rel (%p1424) target = $region56
    $region55: #{pinns_forward.1} parent=5 // pred_region
      %s1427 = ssub.s32 %s13, 2
      // Predicated region
      $region57: #{pinns_forward.1} parent=55 // pred_check
        %p1428 = pneg %p194
      $region58: #{pinns_forward.1} parent=55 // pred_check_branch
        %1430 = sbr.rel (%p1428) target = $region60
      $region59: #{pinns_forward.1} parent=55 // pred_region
        %s1431 = smul.u32 4, %s19
        %p1432 = scmp.lt.s32.totalorder %s1431, 15
        %s1433 = scalar_select %p1432, %s1431, 15
        %s1434 = smul.addr %s1433, 2
        %s1435 = scalar_lea.vmem %s7, %s1434
      $region60: #{pinns_forward.1} parent=55 // pred_fallthru
        _
    $region56: #{pinns_forward.1} parent=5 // pred_fallthru
      _
  $region6: #{pinns_forward.1} parent=0 // loop_footer
    %s17 = sadd.s32 1, %s13
  $region7: #{pinns_forward.1} parent=0 // loop_footer_branch
    %12 = sbr.rel target = $region3
  $region8: #{pinns_forward.1} parent=0 // loop_exit
    _

</llo_original>
